<compile_context>
chip_gen: v5e
topology: v5e:2x2
jax: 0.10.0
libtpu: 0.0.40
codegen_flags: <defaults>
</compile_context>

<pallas_src>
import jax
import jax.numpy as jnp
from jax.experimental import pallas as pl
from jax.experimental.pallas import tpu as pltpu


# ----------------------------------------------------------------------------
# Kernel
# ----------------------------------------------------------------------------
def _make_decode_kernel(img_h: float, img_w: float,
                        chunk_rows: int, n_chunks: int):
    """Kernel closed over static image size and in-block chunking.

    Block shapes seen by the kernel (R = chunk_rows * n_chunks rows of 128
    anchors each):
      anchors_ref : (1, 4,  R, 128)   [x1, y1, x2, y2]
      deltas_ref  : (1, 14, R, 128)   ch 0..3 = bbox deltas, ch 4..13 = ldm
      out_ref     : (1, 14, R, 128)   ch 0..3 = boxes,       ch 4..13 = landmarks
    """

    def decode_chunk(anchors_ref, deltas_ref, out_ref, rs):
        # ---- per-anchor geometry: dense (chunk_rows, 128) slabs -------------
        x1a = anchors_ref[0, 0, rs]
        y1a = anchors_ref[0, 1, rs]
        x2a = anchors_ref[0, 2, rs]
        y2a = anchors_ref[0, 3, rs]

        widths = x2a - x1a
        heights = y2a - y1a
        ctr_x = x1a + 0.5 * widths
        ctr_y = y1a + 0.5 * heights

        # std_box = (0.1, 0.1, 0.2, 0.2); std_ldm = 0.1 (uniform).  Fold the
        # 0.1 factors into the width/height slabs once and reuse for the box
        # centers and all 10 landmark channels.
        w01 = 0.1 * widths
        h01 = 0.1 * heights

        # ---- boxes -----------------------------------------------------------
        pred_ctr_x = ctr_x + deltas_ref[0, 0, rs] * w01
        pred_ctr_y = ctr_y + deltas_ref[0, 1, rs] * h01
        # TODO(synk): exp() is unclamped to match the reference module; a
        # torchvision-style clamp of dw/dh at log(1000/16) would be more robust.
        half_w = (0.5 * widths) * jnp.exp(0.2 * deltas_ref[0, 2, rs])
        half_h = (0.5 * heights) * jnp.exp(0.2 * deltas_ref[0, 3, rs])

        # Direct per-channel stores (lane-dense, unmasked vst); each result
        # vector retires as soon as it is written.
        out_ref[0, 0, rs] = jnp.clip(pred_ctr_x - half_w, 0.0, img_w)
        out_ref[0, 1, rs] = jnp.clip(pred_ctr_y - half_h, 0.0, img_h)
        out_ref[0, 2, rs] = jnp.clip(pred_ctr_x + half_w, 0.0, img_w)
        out_ref[0, 3, rs] = jnp.clip(pred_ctr_y + half_h, 0.0, img_h)

        # ---- landmarks: 5 (x, y) points --------------------------------------
        for i in range(5):
            out_ref[0, 4 + 2 * i, rs] = jnp.clip(
                ctr_x + deltas_ref[0, 4 + 2 * i, rs] * w01, 0.0, img_w)
            out_ref[0, 5 + 2 * i, rs] = jnp.clip(
                ctr_y + deltas_ref[0, 5 + 2 * i, rs] * h01, 0.0, img_h)

    def kernel(anchors_ref, deltas_ref, out_ref):
        if n_chunks == 1:
            decode_chunk(anchors_ref, deltas_ref, out_ref, pl.ds(0, chunk_rows))
        else:
            # Unrolled: small static trip-count, gives the scheduler full
            # load/store interleaving visibility; per-chunk vreg pressure is
            # bounded by the 16-row tiles.
            @pl.loop(0, n_chunks, unroll=True)
            def _(c):
                start = c * chunk_rows
                if chunk_rows % 8 == 0:
                    start = pl.multiple_of(start, chunk_rows)
                decode_chunk(anchors_ref, deltas_ref, out_ref,
                             pl.ds(start, chunk_rows))

    return kernel


# ----------------------------------------------------------------------------
# Channel-major fast path (no transposes)
# ----------------------------------------------------------------------------
def _default_block_rows() -> int:
    """256 rows fits every generation's default scoped-VMEM limit; v7x gets
    512 rows (8 MiB/step) to hide the fixed per-step pipeline overhead behind
    its 3.2 TB/s HBM."""
    try:
        kind = jax.devices()[0].device_kind.lower()
    except Exception:
        kind = ""
    if "v7" in kind or "tpu7" in kind:
        return 512
    return 256


def regression_transform_channel_major(anchors_cm, deltas_cm, img_h, img_w,
                                        *, block_rows: int | None = None):
    """Transpose-free fast path (channel-major, lane-packed layout).

    anchors_cm : (B, 4,  NR, 128) float32   [x1, y1, x2, y2]
    deltas_cm  : (B, 14, NR, 128) float32   ch 0..3 bbox deltas, ch 4..13 ldm
    Returns a packed (B, 14, NR, 128) array: ch 0..3 boxes, ch 4..13 landmarks.
    """
    B, ca, NR, L = anchors_cm.shape
    assert ca == 4 and L == 128
    assert deltas_cm.shape == (B, 14, NR, 128)

    if block_rows is None:
        block_rows = _default_block_rows()

    # Block row count: full extent if the array is small, otherwise a multiple
    # of 8 (second-to-last block dim must be 8-aligned or full-extent).
    if NR <= block_rows:
        R = NR
    else:
        R = max(8, (block_rows // 8) * 8)

    # v7x has 2 TensorCores; make sure the "parallel" grid has >= 2 steps when
    # B == 1 so the second core is not idle (free on v5e/v6e).
    if B == 1 and NR > 8 and pl.cdiv(NR, R) < 2:
        R = max(8, ((NR - 1) // 8) * 8)

    # Chunk the in-block compute to bound vreg live ranges at large R.
    if R % 16 == 0 and R > 16:
        chunk_rows = 16
    elif R % 8 == 0 and R > 8:
        chunk_rows = 8
    else:
        chunk_rows = R
    n_chunks = R // chunk_rows

    kernel = _make_decode_kernel(float(img_h), float(img_w), chunk_rows, n_chunks)

    spec4 = pl.BlockSpec((1, 4, R, 128), lambda b, r: (b, 0, r, 0))
    spec14 = pl.BlockSpec((1, 14, R, 128), lambda b, r: (b, 0, r, 0))

    grid = (B, pl.cdiv(NR, R))  # ragged final row-block handled by Pallas

    # Double-buffered VMEM footprint of the 3 streams; raise the scoped limit
    # only when a big block would not fit v5e's 16 MiB default.
    dbuf_bytes = 2 * (4 + 14 + 14) * R * 128 * 4
    cp_kwargs = dict(dimension_semantics=("parallel", "parallel"))
    if dbuf_bytes > (12 << 20):
        cp_kwargs["vmem_limit_bytes"] = 48 << 20

    # TODO(synk): bf16 outputs would cut ~25% of HBM traffic but are
    # accuracy-gated (up to ~8 px error near coord 2048); left as f32.
    return pl.pallas_call(
        kernel,
        out_shape=jax.ShapeDtypeStruct((B, 14, NR, 128), jnp.float32),
        grid_spec=pltpu.PrefetchScalarGridSpec(
            num_scalar_prefetch=0,
            grid=grid,
            in_specs=[spec4, spec14],
            out_specs=spec14,
        ),
        compiler_params=pltpu.CompilerParams(**cp_kwargs),
    )(anchors_cm, deltas_cm)


# ----------------------------------------------------------------------------
# PyTorch-layout wrapper (keeps the original forward() contract)
# ----------------------------------------------------------------------------
def regression_transform(anchors, bbox_deltas, ldm_deltas, img,
                         *, block_rows: int | None = None):
    """JAX/Pallas equivalent of RegressionTransform.forward (PyTorch layout).

    anchors:     (B, N, 4) float32
    bbox_deltas: (B, N, 4) float32
    ldm_deltas:  (B, N, 10) float32
    img:         (B, C, H, W)  (only the shape is used)
    returns (pred_boxes (B, N, 4), pred_landmarks (B, N, 10))
    """
    B, N, _ = anchors.shape
    _, _, H, W = img.shape
    NR = (N + 127) // 128
    N_pad = NR * 128

    # TODO(synk): this (B, N, C) <-> channel-major round-trip roughly triples
    # the HBM traffic of a purely mem-bound op; callers that can produce and
    # consume channel-major data should call
    # regression_transform_channel_major directly and skip these transposes.
    deltas = jnp.concatenate(
        [bbox_deltas.astype(jnp.float32), ldm_deltas.astype(jnp.float32)],
        axis=-1)  # (B, N, 14)

    def to_cm(x, C):
        x = x.astype(jnp.float32)
        if N_pad != N:
            x = jnp.pad(x, ((0, 0), (0, N_pad - N), (0, 0)))
        return jnp.transpose(x, (0, 2, 1)).reshape(B, C, NR, 128)

    out_cm = regression_transform_channel_major(
        to_cm(anchors, 4), to_cm(deltas, 14), H, W, block_rows=block_rows)

    out = jnp.transpose(out_cm.reshape(B, 14, N_pad), (0, 2, 1))[:, :N, :]
    return out[:, :, :4], out[:, :, 4:]


# ----------------------------------------------------------------------------
# Pure-JAX reference (mirrors the PyTorch forward) for validation
# ----------------------------------------------------------------------------
def _reference(anchors, bbox_deltas, ldm_deltas, img):
    std_box = jnp.array([0.1, 0.1, 0.2, 0.2], jnp.float32)
    std_ldm = jnp.full((10,), 0.1, jnp.float32)
    widths = anchors[:, :, 2] - anchors[:, :, 0]
    heights = anchors[:, :, 3] - anchors[:, :, 1]
    ctr_x = anchors[:, :, 0] + 0.5 * widths
    ctr_y = anchors[:, :, 1] + 0.5 * heights
    ld = ldm_deltas * std_ldm
    bd = bbox_deltas * std_box
    pred_ctr_x = ctr_x + bd[:, :, 0] * widths
    pred_ctr_y = ctr_y + bd[:, :, 1] * heights
    pred_w = jnp.exp(bd[:, :, 2]) * widths
    pred_h = jnp.exp(bd[:, :, 3]) * heights
    boxes = jnp.stack([pred_ctr_x - 0.5 * pred_w, pred_ctr_y - 0.5 * pred_h,
                       pred_ctr_x + 0.5 * pred_w, pred_ctr_y + 0.5 * pred_h],
                      axis=2)
    pts = []
    for i in range(5):
        pts.append(ctr_x + ld[:, :, 2 * i] * widths)
        pts.append(ctr_y + ld[:, :, 2 * i + 1] * heights)
    lms = jnp.stack(pts, axis=2)
    _, _, H, W = img.shape
    boxes = boxes.at[:, :, ::2].set(jnp.clip(boxes[:, :, ::2], 0, W))
    boxes = boxes.at[:, :, 1::2].set(jnp.clip(boxes[:, :, 1::2], 0, H))
    lms = lms.at[:, :, ::2].set(jnp.clip(lms[:, :, ::2], 0, W))
    lms = lms.at[:, :, 1::2].set(jnp.clip(lms[:, :, 1::2], 0, H))
    return boxes, lms


if __name__ == "__main__":
    key = jax.random.PRNGKey(0)
    k1, k2, k3, k4 = jax.random.split(key, 4)

    B, N = 2, 4000          # N not a multiple of 128 -> exercises padding + chunk loop
    C, H, W = 3, 32, 32     # image: only the shape is consumed

    # anchors as valid [x1, y1, x2, y2] boxes inside the image
    centers = jax.random.uniform(k1, (B, N, 2), jnp.float32, 6.0, 26.0)
    sizes = jax.random.uniform(k2, (B, N, 2), jnp.float32, 1.0, 4.0)
    anchors = jnp.concatenate([centers - sizes, centers + sizes], axis=-1)

    bbox_deltas = jax.random.normal(k3, (B, N, 4), jnp.float32)
    ldm_deltas = jax.random.normal(k4, (B, N, 10), jnp.float32)
    img = jnp.zeros((B, C, H, W), jnp.float32)

    ref_boxes, ref_landmarks = _reference(anchors, bbox_deltas, ldm_deltas, img)

    # B = 2 path
    boxes, landmarks = regression_transform(anchors, bbox_deltas, ldm_deltas, img)
    jax.block_until_ready((boxes, landmarks))
    assert boxes.shape == (B, N, 4) and landmarks.shape == (B, N, 10)
    assert jnp.allclose(boxes, ref_boxes, atol=1e-5, rtol=1e-5)
    assert jnp.allclose(landmarks, ref_landmarks, atol=1e-5, rtol=1e-5)

    # B = 1 path (exercises the >=2-parallel-step grid split + ragged row-block)
    b1_boxes, b1_lms = regression_transform(
        anchors[:1], bbox_deltas[:1], ldm_deltas[:1], img[:1])
    jax.block_until_ready((b1_boxes, b1_lms))
    assert jnp.allclose(b1_boxes, ref_boxes[:1], atol=1e-5, rtol=1e-5)
    assert jnp.allclose(b1_lms, ref_landmarks[:1], atol=1e-5, rtol=1e-5)

    print("KERNEL_OK")
</pallas_src>

<mosaic_0001>
module attributes {stable_mosaic.version = 11 : i64} {
  func.func @kernel(%arg0: i32, %arg1: i32, %arg2: memref<1x4x32x128xf32, #tpu.memory_space<vmem>>, %arg3: memref<1x14x32x128xf32, #tpu.memory_space<vmem>>, %arg4: memref<1x14x32x128xf32, #tpu.memory_space<vmem>>) attributes {dimension_semantics = [#tpu.dimension_semantics<parallel>, #tpu.dimension_semantics<parallel>], iteration_bounds = array<i64: 2, 1>, scalar_prefetch = 0 : i64, scratch_operands = 0 : i64, tpu.core_type = #tpu.core_type<tc>, window_params = [{transform_indices = @transform_0, window_bounds = array<i64: 1, 4, 32, 128>}, {transform_indices = @transform_1, window_bounds = array<i64: 1, 14, 32, 128>}, {transform_indices = @transform_2, window_bounds = array<i64: 1, 14, 32, 128>}]} {
    %c0_i32 = arith.constant 0 : i32
    %c1_i32 = arith.constant 1 : i32
    %0 = arith.muli %c0_i32, %c1_i32 : i32
    %c0_i32_0 = arith.constant 0 : i32
    %1 = arith.addi %c0_i32_0, %0 : i32
    %c16_i32 = arith.constant 16 : i32
    %2 = arith.muli %1, %c16_i32 : i32
    %3 = tpu.assume_multiple %2, 16 : i32
    %c0 = arith.constant 0 : index
    %c0_1 = arith.constant 0 : index
    %4 = arith.index_cast %3 : i32 to index
    %c0_2 = arith.constant 0 : index
    %5 = vector.load %arg2[%c0, %c0_1, %4, %c0_2] : memref<1x4x32x128xf32, #tpu.memory_space<vmem>>, vector<1x1x16x128xf32>
    %6 = vector.shape_cast %5 : vector<1x1x16x128xf32> to vector<16x128xf32>
    %c0_3 = arith.constant 0 : index
    %c1 = arith.constant 1 : index
    %7 = arith.index_cast %3 : i32 to index
    %c0_4 = arith.constant 0 : index
    %8 = vector.load %arg2[%c0_3, %c1, %7, %c0_4] : memref<1x4x32x128xf32, #tpu.memory_space<vmem>>, vector<1x1x16x128xf32>
    %9 = vector.shape_cast %8 : vector<1x1x16x128xf32> to vector<16x128xf32>
    %c0_5 = arith.constant 0 : index
    %c2 = arith.constant 2 : index
    %10 = arith.index_cast %3 : i32 to index
    %c0_6 = arith.constant 0 : index
    %11 = vector.load %arg2[%c0_5, %c2, %10, %c0_6] : memref<1x4x32x128xf32, #tpu.memory_space<vmem>>, vector<1x1x16x128xf32>
    %12 = vector.shape_cast %11 : vector<1x1x16x128xf32> to vector<16x128xf32>
    %c0_7 = arith.constant 0 : index
    %c3 = arith.constant 3 : index
    %13 = arith.index_cast %3 : i32 to index
    %c0_8 = arith.constant 0 : index
    %14 = vector.load %arg2[%c0_7, %c3, %13, %c0_8] : memref<1x4x32x128xf32, #tpu.memory_space<vmem>>, vector<1x1x16x128xf32>
    %15 = vector.shape_cast %14 : vector<1x1x16x128xf32> to vector<16x128xf32>
    %16 = arith.subf %12, %6 : vector<16x128xf32>
    %17 = arith.subf %15, %9 : vector<16x128xf32>
    %cst = arith.constant 5.000000e-01 : f32
    %18 = vector.broadcast %cst : f32 to vector<16x128xf32>
    %19 = arith.mulf %18, %16 : vector<16x128xf32>
    %20 = arith.addf %6, %19 : vector<16x128xf32>
    %cst_9 = arith.constant 5.000000e-01 : f32
    %21 = vector.broadcast %cst_9 : f32 to vector<16x128xf32>
    %22 = arith.mulf %21, %17 : vector<16x128xf32>
    %23 = arith.addf %9, %22 : vector<16x128xf32>
    %cst_10 = arith.constant 1.000000e-01 : f32
    %24 = vector.broadcast %cst_10 : f32 to vector<16x128xf32>
    %25 = arith.mulf %24, %16 : vector<16x128xf32>
    %cst_11 = arith.constant 1.000000e-01 : f32
    %26 = vector.broadcast %cst_11 : f32 to vector<16x128xf32>
    %27 = arith.mulf %26, %17 : vector<16x128xf32>
    %c0_12 = arith.constant 0 : index
    %c0_13 = arith.constant 0 : index
    %28 = arith.index_cast %3 : i32 to index
    %c0_14 = arith.constant 0 : index
    %29 = vector.load %arg3[%c0_12, %c0_13, %28, %c0_14] : memref<1x14x32x128xf32, #tpu.memory_space<vmem>>, vector<1x1x16x128xf32>
    %30 = vector.shape_cast %29 : vector<1x1x16x128xf32> to vector<16x128xf32>
    %31 = arith.mulf %30, %25 : vector<16x128xf32>
    %32 = arith.addf %20, %31 : vector<16x128xf32>
    %c0_15 = arith.constant 0 : index
    %c1_16 = arith.constant 1 : index
    %33 = arith.index_cast %3 : i32 to index
    %c0_17 = arith.constant 0 : index
    %34 = vector.load %arg3[%c0_15, %c1_16, %33, %c0_17] : memref<1x14x32x128xf32, #tpu.memory_space<vmem>>, vector<1x1x16x128xf32>
    %35 = vector.shape_cast %34 : vector<1x1x16x128xf32> to vector<16x128xf32>
    %36 = arith.mulf %35, %27 : vector<16x128xf32>
    %37 = arith.addf %23, %36 : vector<16x128xf32>
    %cst_18 = arith.constant 5.000000e-01 : f32
    %38 = vector.broadcast %cst_18 : f32 to vector<16x128xf32>
    %39 = arith.mulf %38, %16 : vector<16x128xf32>
    %c0_19 = arith.constant 0 : index
    %c2_20 = arith.constant 2 : index
    %40 = arith.index_cast %3 : i32 to index
    %c0_21 = arith.constant 0 : index
    %41 = vector.load %arg3[%c0_19, %c2_20, %40, %c0_21] : memref<1x14x32x128xf32, #tpu.memory_space<vmem>>, vector<1x1x16x128xf32>
    %42 = vector.shape_cast %41 : vector<1x1x16x128xf32> to vector<16x128xf32>
    %cst_22 = arith.constant 2.000000e-01 : f32
    %43 = vector.broadcast %cst_22 : f32 to vector<16x128xf32>
    %44 = arith.mulf %43, %42 : vector<16x128xf32>
    %45 = math.exp %44 : vector<16x128xf32>
    %46 = arith.mulf %39, %45 : vector<16x128xf32>
    %cst_23 = arith.constant 5.000000e-01 : f32
    %47 = vector.broadcast %cst_23 : f32 to vector<16x128xf32>
    %48 = arith.mulf %47, %17 : vector<16x128xf32>
    %c0_24 = arith.constant 0 : index
    %c3_25 = arith.constant 3 : index
    %49 = arith.index_cast %3 : i32 to index
    %c0_26 = arith.constant 0 : index
    %50 = vector.load %arg3[%c0_24, %c3_25, %49, %c0_26] : memref<1x14x32x128xf32, #tpu.memory_space<vmem>>, vector<1x1x16x128xf32>
    %51 = vector.shape_cast %50 : vector<1x1x16x128xf32> to vector<16x128xf32>
    %cst_27 = arith.constant 2.000000e-01 : f32
    %52 = vector.broadcast %cst_27 : f32 to vector<16x128xf32>
    %53 = arith.mulf %52, %51 : vector<16x128xf32>
    %54 = math.exp %53 : vector<16x128xf32>
    %55 = arith.mulf %48, %54 : vector<16x128xf32>
    %56 = arith.subf %32, %46 : vector<16x128xf32>
    %cst_28 = arith.constant 0.000000e+00 : f32
    %cst_29 = arith.constant 3.200000e+01 : f32
    %57 = vector.broadcast %cst_28 : f32 to vector<16x128xf32>
    %58 = arith.maximumf %57, %56 : vector<16x128xf32>
    %59 = vector.broadcast %cst_29 : f32 to vector<16x128xf32>
    %60 = arith.minimumf %59, %58 : vector<16x128xf32>
    %c0_30 = arith.constant 0 : index
    %c0_31 = arith.constant 0 : index
    %61 = arith.index_cast %3 : i32 to index
    %c0_32 = arith.constant 0 : index
    %62 = vector.load %arg4[%c0_30, %c0_31, %61, %c0_32] : memref<1x14x32x128xf32, #tpu.memory_space<vmem>>, vector<1x1x16x128xf32>
    %63 = vector.shape_cast %62 : vector<1x1x16x128xf32> to vector<16x128xf32>
    %64 = vector.shape_cast %60 : vector<16x128xf32> to vector<1x1x16x128xf32>
    tpu.vector_store %arg4[%c0_30, %c0_31, %61, %c0_32], %64 {strides = array<i32>} : memref<1x14x32x128xf32, #tpu.memory_space<vmem>>, vector<1x1x16x128xf32>,
    %65 = arith.subf %37, %55 : vector<16x128xf32>
    %cst_33 = arith.constant 0.000000e+00 : f32
    %cst_34 = arith.constant 3.200000e+01 : f32
    %66 = vector.broadcast %cst_33 : f32 to vector<16x128xf32>
    %67 = arith.maximumf %66, %65 : vector<16x128xf32>
    %68 = vector.broadcast %cst_34 : f32 to vector<16x128xf32>
    %69 = arith.minimumf %68, %67 : vector<16x128xf32>
    %c0_35 = arith.constant 0 : index
    %c1_36 = arith.constant 1 : index
    %70 = arith.index_cast %3 : i32 to index
    %c0_37 = arith.constant 0 : index
    %71 = vector.load %arg4[%c0_35, %c1_36, %70, %c0_37] : memref<1x14x32x128xf32, #tpu.memory_space<vmem>>, vector<1x1x16x128xf32>
    %72 = vector.shape_cast %71 : vector<1x1x16x128xf32> to vector<16x128xf32>
    %73 = vector.shape_cast %69 : vector<16x128xf32> to vector<1x1x16x128xf32>
    tpu.vector_store %arg4[%c0_35, %c1_36, %70, %c0_37], %73 {strides = array<i32>} : memref<1x14x32x128xf32, #tpu.memory_space<vmem>>, vector<1x1x16x128xf32>,
    %74 = arith.addf %32, %46 : vector<16x128xf32>
    %cst_38 = arith.constant 0.000000e+00 : f32
    %cst_39 = arith.constant 3.200000e+01 : f32
    %75 = vector.broadcast %cst_38 : f32 to vector<16x128xf32>
    %76 = arith.maximumf %75, %74 : vector<16x128xf32>
    %77 = vector.broadcast %cst_39 : f32 to vector<16x128xf32>
    %78 = arith.minimumf %77, %76 : vector<16x128xf32>
    %c0_40 = arith.constant 0 : index
    %c2_41 = arith.constant 2 : index
    %79 = arith.index_cast %3 : i32 to index
    %c0_42 = arith.constant 0 : index
    %80 = vector.load %arg4[%c0_40, %c2_41, %79, %c0_42] : memref<1x14x32x128xf32, #tpu.memory_space<vmem>>, vector<1x1x16x128xf32>
    %81 = vector.shape_cast %80 : vector<1x1x16x128xf32> to vector<16x128xf32>
    %82 = vector.shape_cast %78 : vector<16x128xf32> to vector<1x1x16x128xf32>
    tpu.vector_store %arg4[%c0_40, %c2_41, %79, %c0_42], %82 {strides = array<i32>} : memref<1x14x32x128xf32, #tpu.memory_space<vmem>>, vector<1x1x16x128xf32>,
    %83 = arith.addf %37, %55 : vector<16x128xf32>
    %cst_43 = arith.constant 0.000000e+00 : f32
    %cst_44 = arith.constant 3.200000e+01 : f32
    %84 = vector.broadcast %cst_43 : f32 to vector<16x128xf32>
    %85 = arith.maximumf %84, %83 : vector<16x128xf32>
    %86 = vector.broadcast %cst_44 : f32 to vector<16x128xf32>
    %87 = arith.minimumf %86, %85 : vector<16x128xf32>
    %c0_45 = arith.constant 0 : index
    %c3_46 = arith.constant 3 : index
    %88 = arith.index_cast %3 : i32 to index
    %c0_47 = arith.constant 0 : index
    %89 = vector.load %arg4[%c0_45, %c3_46, %88, %c0_47] : memref<1x14x32x128xf32, #tpu.memory_space<vmem>>, vector<1x1x16x128xf32>
    %90 = vector.shape_cast %89 : vector<1x1x16x128xf32> to vector<16x128xf32>
    %91 = vector.shape_cast %87 : vector<16x128xf32> to vector<1x1x16x128xf32>
    tpu.vector_store %arg4[%c0_45, %c3_46, %88, %c0_47], %91 {strides = array<i32>} : memref<1x14x32x128xf32, #tpu.memory_space<vmem>>, vector<1x1x16x128xf32>,
    %c0_48 = arith.constant 0 : index
    %c4 = arith.constant 4 : index
    %92 = arith.index_cast %3 : i32 to index
    %c0_49 = arith.constant 0 : index
    %93 = vector.load %arg3[%c0_48, %c4, %92, %c0_49] : memref<1x14x32x128xf32, #tpu.memory_space<vmem>>, vector<1x1x16x128xf32>
    %94 = vector.shape_cast %93 : vector<1x1x16x128xf32> to vector<16x128xf32>
    %95 = arith.mulf %94, %25 : vector<16x128xf32>
    %96 = arith.addf %20, %95 : vector<16x128xf32>
    %cst_50 = arith.constant 0.000000e+00 : f32
    %cst_51 = arith.constant 3.200000e+01 : f32
    %97 = vector.broadcast %cst_50 : f32 to vector<16x128xf32>
    %98 = arith.maximumf %97, %96 : vector<16x128xf32>
    %99 = vector.broadcast %cst_51 : f32 to vector<16x128xf32>
    %100 = arith.minimumf %99, %98 : vector<16x128xf32>
    %c0_52 = arith.constant 0 : index
    %c4_53 = arith.constant 4 : index
    %101 = arith.index_cast %3 : i32 to index
    %c0_54 = arith.constant 0 : index
    %102 = vector.load %arg4[%c0_52, %c4_53, %101, %c0_54] : memref<1x14x32x128xf32, #tpu.memory_space<vmem>>, vector<1x1x16x128xf32>
    %103 = vector.shape_cast %102 : vector<1x1x16x128xf32> to vector<16x128xf32>
    %104 = vector.shape_cast %100 : vector<16x128xf32> to vector<1x1x16x128xf32>
    tpu.vector_store %arg4[%c0_52, %c4_53, %101, %c0_54], %104 {strides = array<i32>} : memref<1x14x32x128xf32, #tpu.memory_space<vmem>>, vector<1x1x16x128xf32>,
    %c0_55 = arith.constant 0 : index
    %c5 = arith.constant 5 : index
    %105 = arith.index_cast %3 : i32 to index
    %c0_56 = arith.constant 0 : index
    %106 = vector.load %arg3[%c0_55, %c5, %105, %c0_56] : memref<1x14x32x128xf32, #tpu.memory_space<vmem>>, vector<1x1x16x128xf32>
    %107 = vector.shape_cast %106 : vector<1x1x16x128xf32> to vector<16x128xf32>
    %108 = arith.mulf %107, %27 : vector<16x128xf32>
    %109 = arith.addf %23, %108 : vector<16x128xf32>
    %cst_57 = arith.constant 0.000000e+00 : f32
    %cst_58 = arith.constant 3.200000e+01 : f32
    %110 = vector.broadcast %cst_57 : f32 to vector<16x128xf32>
    %111 = arith.maximumf %110, %109 : vector<16x128xf32>
    %112 = vector.broadcast %cst_58 : f32 to vector<16x128xf32>
    %113 = arith.minimumf %112, %111 : vector<16x128xf32>
    %c0_59 = arith.constant 0 : index
    %c5_60 = arith.constant 5 : index
    %114 = arith.index_cast %3 : i32 to index
    %c0_61 = arith.constant 0 : index
    %115 = vector.load %arg4[%c0_59, %c5_60, %114, %c0_61] : memref<1x14x32x128xf32, #tpu.memory_space<vmem>>, vector<1x1x16x128xf32>
    %116 = vector.shape_cast %115 : vector<1x1x16x128xf32> to vector<16x128xf32>
    %117 = vector.shape_cast %113 : vector<16x128xf32> to vector<1x1x16x128xf32>
    tpu.vector_store %arg4[%c0_59, %c5_60, %114, %c0_61], %117 {strides = array<i32>} : memref<1x14x32x128xf32, #tpu.memory_space<vmem>>, vector<1x1x16x128xf32>,
    %c0_62 = arith.constant 0 : index
    %c6 = arith.constant 6 : index
    %118 = arith.index_cast %3 : i32 to index
    %c0_63 = arith.constant 0 : index
    %119 = vector.load %arg3[%c0_62, %c6, %118, %c0_63] : memref<1x14x32x128xf32, #tpu.memory_space<vmem>>, vector<1x1x16x128xf32>
    %120 = vector.shape_cast %119 : vector<1x1x16x128xf32> to vector<16x128xf32>
    %121 = arith.mulf %120, %25 : vector<16x128xf32>
    %122 = arith.addf %20, %121 : vector<16x128xf32>
    %cst_64 = arith.constant 0.000000e+00 : f32
    %cst_65 = arith.constant 3.200000e+01 : f32
    %123 = vector.broadcast %cst_64 : f32 to vector<16x128xf32>
    %124 = arith.maximumf %123, %122 : vector<16x128xf32>
    %125 = vector.broadcast %cst_65 : f32 to vector<16x128xf32>
    %126 = arith.minimumf %125, %124 : vector<16x128xf32>
    %c0_66 = arith.constant 0 : index
    %c6_67 = arith.constant 6 : index
    %127 = arith.index_cast %3 : i32 to index
    %c0_68 = arith.constant 0 : index
    %128 = vector.load %arg4[%c0_66, %c6_67, %127, %c0_68] : memref<1x14x32x128xf32, #tpu.memory_space<vmem>>, vector<1x1x16x128xf32>
    %129 = vector.shape_cast %128 : vector<1x1x16x128xf32> to vector<16x128xf32>
    %130 = vector.shape_cast %126 : vector<16x128xf32> to vector<1x1x16x128xf32>
    tpu.vector_store %arg4[%c0_66, %c6_67, %127, %c0_68], %130 {strides = array<i32>} : memref<1x14x32x128xf32, #tpu.memory_space<vmem>>, vector<1x1x16x128xf32>,
    %c0_69 = arith.constant 0 : index
    %c7 = arith.constant 7 : index
    %131 = arith.index_cast %3 : i32 to index
    %c0_70 = arith.constant 0 : index
    %132 = vector.load %arg3[%c0_69, %c7, %131, %c0_70] : memref<1x14x32x128xf32, #tpu.memory_space<vmem>>, vector<1x1x16x128xf32>
    %133 = vector.shape_cast %132 : vector<1x1x16x128xf32> to vector<16x128xf32>
    %134 = arith.mulf %133, %27 : vector<16x128xf32>
    %135 = arith.addf %23, %134 : vector<16x128xf32>
    %cst_71 = arith.constant 0.000000e+00 : f32
    %cst_72 = arith.constant 3.200000e+01 : f32
    %136 = vector.broadcast %cst_71 : f32 to vector<16x128xf32>
    %137 = arith.maximumf %136, %135 : vector<16x128xf32>
    %138 = vector.broadcast %cst_72 : f32 to vector<16x128xf32>
    %139 = arith.minimumf %138, %137 : vector<16x128xf32>
    %c0_73 = arith.constant 0 : index
    %c7_74 = arith.constant 7 : index
    %140 = arith.index_cast %3 : i32 to index
    %c0_75 = arith.constant 0 : index
    %141 = vector.load %arg4[%c0_73, %c7_74, %140, %c0_75] : memref<1x14x32x128xf32, #tpu.memory_space<vmem>>, vector<1x1x16x128xf32>
    %142 = vector.shape_cast %141 : vector<1x1x16x128xf32> to vector<16x128xf32>
    %143 = vector.shape_cast %139 : vector<16x128xf32> to vector<1x1x16x128xf32>
    tpu.vector_store %arg4[%c0_73, %c7_74, %140, %c0_75], %143 {strides = array<i32>} : memref<1x14x32x128xf32, #tpu.memory_space<vmem>>, vector<1x1x16x128xf32>,
    %c0_76 = arith.constant 0 : index
    %c8 = arith.constant 8 : index
    %144 = arith.index_cast %3 : i32 to index
    %c0_77 = arith.constant 0 : index
    %145 = vector.load %arg3[%c0_76, %c8, %144, %c0_77] : memref<1x14x32x128xf32, #tpu.memory_space<vmem>>, vector<1x1x16x128xf32>
    %146 = vector.shape_cast %145 : vector<1x1x16x128xf32> to vector<16x128xf32>
    %147 = arith.mulf %146, %25 : vector<16x128xf32>
    %148 = arith.addf %20, %147 : vector<16x128xf32>
    %cst_78 = arith.constant 0.000000e+00 : f32
    %cst_79 = arith.constant 3.200000e+01 : f32
    %149 = vector.broadcast %cst_78 : f32 to vector<16x128xf32>
    %150 = arith.maximumf %149, %148 : vector<16x128xf32>
    %151 = vector.broadcast %cst_79 : f32 to vector<16x128xf32>
    %152 = arith.minimumf %151, %150 : vector<16x128xf32>
    %c0_80 = arith.constant 0 : index
    %c8_81 = arith.constant 8 : index
    %153 = arith.index_cast %3 : i32 to index
    %c0_82 = arith.constant 0 : index
    %154 = vector.load %arg4[%c0_80, %c8_81, %153, %c0_82] : memref<1x14x32x128xf32, #tpu.memory_space<vmem>>, vector<1x1x16x128xf32>
    %155 = vector.shape_cast %154 : vector<1x1x16x128xf32> to vector<16x128xf32>
    %156 = vector.shape_cast %152 : vector<16x128xf32> to vector<1x1x16x128xf32>
    tpu.vector_store %arg4[%c0_80, %c8_81, %153, %c0_82], %156 {strides = array<i32>} : memref<1x14x32x128xf32, #tpu.memory_space<vmem>>, vector<1x1x16x128xf32>,
    %c0_83 = arith.constant 0 : index
    %c9 = arith.constant 9 : index
    %157 = arith.index_cast %3 : i32 to index
    %c0_84 = arith.constant 0 : index
    %158 = vector.load %arg3[%c0_83, %c9, %157, %c0_84] : memref<1x14x32x128xf32, #tpu.memory_space<vmem>>, vector<1x1x16x128xf32>
    %159 = vector.shape_cast %158 : vector<1x1x16x128xf32> to vector<16x128xf32>
    %160 = arith.mulf %159, %27 : vector<16x128xf32>
    %161 = arith.addf %23, %160 : vector<16x128xf32>
    %cst_85 = arith.constant 0.000000e+00 : f32
    %cst_86 = arith.constant 3.200000e+01 : f32
    %162 = vector.broadcast %cst_85 : f32 to vector<16x128xf32>
    %163 = arith.maximumf %162, %161 : vector<16x128xf32>
    %164 = vector.broadcast %cst_86 : f32 to vector<16x128xf32>
    %165 = arith.minimumf %164, %163 : vector<16x128xf32>
    %c0_87 = arith.constant 0 : index
    %c9_88 = arith.constant 9 : index
    %166 = arith.index_cast %3 : i32 to index
    %c0_89 = arith.constant 0 : index
    %167 = vector.load %arg4[%c0_87, %c9_88, %166, %c0_89] : memref<1x14x32x128xf32, #tpu.memory_space<vmem>>, vector<1x1x16x128xf32>
    %168 = vector.shape_cast %167 : vector<1x1x16x128xf32> to vector<16x128xf32>
    %169 = vector.shape_cast %165 : vector<16x128xf32> to vector<1x1x16x128xf32>
    tpu.vector_store %arg4[%c0_87, %c9_88, %166, %c0_89], %169 {strides = array<i32>} : memref<1x14x32x128xf32, #tpu.memory_space<vmem>>, vector<1x1x16x128xf32>,
    %c0_90 = arith.constant 0 : index
    %c10 = arith.constant 10 : index
    %170 = arith.index_cast %3 : i32 to index
    %c0_91 = arith.constant 0 : index
    %171 = vector.load %arg3[%c0_90, %c10, %170, %c0_91] : memref<1x14x32x128xf32, #tpu.memory_space<vmem>>, vector<1x1x16x128xf32>
    %172 = vector.shape_cast %171 : vector<1x1x16x128xf32> to vector<16x128xf32>
    %173 = arith.mulf %172, %25 : vector<16x128xf32>
    %174 = arith.addf %20, %173 : vector<16x128xf32>
    %cst_92 = arith.constant 0.000000e+00 : f32
    %cst_93 = arith.constant 3.200000e+01 : f32
    %175 = vector.broadcast %cst_92 : f32 to vector<16x128xf32>
    %176 = arith.maximumf %175, %174 : vector<16x128xf32>
    %177 = vector.broadcast %cst_93 : f32 to vector<16x128xf32>
    %178 = arith.minimumf %177, %176 : vector<16x128xf32>
    %c0_94 = arith.constant 0 : index
    %c10_95 = arith.constant 10 : index
    %179 = arith.index_cast %3 : i32 to index
    %c0_96 = arith.constant 0 : index
    %180 = vector.load %arg4[%c0_94, %c10_95, %179, %c0_96] : memref<1x14x32x128xf32, #tpu.memory_space<vmem>>, vector<1x1x16x128xf32>
    %181 = vector.shape_cast %180 : vector<1x1x16x128xf32> to vector<16x128xf32>
    %182 = vector.shape_cast %178 : vector<16x128xf32> to vector<1x1x16x128xf32>
    tpu.vector_store %arg4[%c0_94, %c10_95, %179, %c0_96], %182 {strides = array<i32>} : memref<1x14x32x128xf32, #tpu.memory_space<vmem>>, vector<1x1x16x128xf32>,
    %c0_97 = arith.constant 0 : index
    %c11 = arith.constant 11 : index
    %183 = arith.index_cast %3 : i32 to index
    %c0_98 = arith.constant 0 : index
    %184 = vector.load %arg3[%c0_97, %c11, %183, %c0_98] : memref<1x14x32x128xf32, #tpu.memory_space<vmem>>, vector<1x1x16x128xf32>
    %185 = vector.shape_cast %184 : vector<1x1x16x128xf32> to vector<16x128xf32>
    %186 = arith.mulf %185, %27 : vector<16x128xf32>
    %187 = arith.addf %23, %186 : vector<16x128xf32>
    %cst_99 = arith.constant 0.000000e+00 : f32
    %cst_100 = arith.constant 3.200000e+01 : f32
    %188 = vector.broadcast %cst_99 : f32 to vector<16x128xf32>
    %189 = arith.maximumf %188, %187 : vector<16x128xf32>
    %190 = vector.broadcast %cst_100 : f32 to vector<16x128xf32>
    %191 = arith.minimumf %190, %189 : vector<16x128xf32>
    %c0_101 = arith.constant 0 : index
    %c11_102 = arith.constant 11 : index
    %192 = arith.index_cast %3 : i32 to index
    %c0_103 = arith.constant 0 : index
    %193 = vector.load %arg4[%c0_101, %c11_102, %192, %c0_103] : memref<1x14x32x128xf32, #tpu.memory_space<vmem>>, vector<1x1x16x128xf32>
    %194 = vector.shape_cast %193 : vector<1x1x16x128xf32> to vector<16x128xf32>
    %195 = vector.shape_cast %191 : vector<16x128xf32> to vector<1x1x16x128xf32>
    tpu.vector_store %arg4[%c0_101, %c11_102, %192, %c0_103], %195 {strides = array<i32>} : memref<1x14x32x128xf32, #tpu.memory_space<vmem>>, vector<1x1x16x128xf32>,
    %c0_104 = arith.constant 0 : index
    %c12 = arith.constant 12 : index
    %196 = arith.index_cast %3 : i32 to index
    %c0_105 = arith.constant 0 : index
    %197 = vector.load %arg3[%c0_104, %c12, %196, %c0_105] : memref<1x14x32x128xf32, #tpu.memory_space<vmem>>, vector<1x1x16x128xf32>
    %198 = vector.shape_cast %197 : vector<1x1x16x128xf32> to vector<16x128xf32>
    %199 = arith.mulf %198, %25 : vector<16x128xf32>
    %200 = arith.addf %20, %199 : vector<16x128xf32>
    %cst_106 = arith.constant 0.000000e+00 : f32
    %cst_107 = arith.constant 3.200000e+01 : f32
    %201 = vector.broadcast %cst_106 : f32 to vector<16x128xf32>
    %202 = arith.maximumf %201, %200 : vector<16x128xf32>
    %203 = vector.broadcast %cst_107 : f32 to vector<16x128xf32>
    %204 = arith.minimumf %203, %202 : vector<16x128xf32>
    %c0_108 = arith.constant 0 : index
    %c12_109 = arith.constant 12 : index
    %205 = arith.index_cast %3 : i32 to index
    %c0_110 = arith.constant 0 : index
    %206 = vector.load %arg4[%c0_108, %c12_109, %205, %c0_110] : memref<1x14x32x128xf32, #tpu.memory_space<vmem>>, vector<1x1x16x128xf32>
    %207 = vector.shape_cast %206 : vector<1x1x16x128xf32> to vector<16x128xf32>
    %208 = vector.shape_cast %204 : vector<16x128xf32> to vector<1x1x16x128xf32>
    tpu.vector_store %arg4[%c0_108, %c12_109, %205, %c0_110], %208 {strides = array<i32>} : memref<1x14x32x128xf32, #tpu.memory_space<vmem>>, vector<1x1x16x128xf32>,
    %c0_111 = arith.constant 0 : index
    %c13 = arith.constant 13 : index
    %209 = arith.index_cast %3 : i32 to index
    %c0_112 = arith.constant 0 : index
    %210 = vector.load %arg3[%c0_111, %c13, %209, %c0_112] : memref<1x14x32x128xf32, #tpu.memory_space<vmem>>, vector<1x1x16x128xf32>
    %211 = vector.shape_cast %210 : vector<1x1x16x128xf32> to vector<16x128xf32>
    %212 = arith.mulf %211, %27 : vector<16x128xf32>
    %213 = arith.addf %23, %212 : vector<16x128xf32>
    %cst_113 = arith.constant 0.000000e+00 : f32
    %cst_114 = arith.constant 3.200000e+01 : f32
    %214 = vector.broadcast %cst_113 : f32 to vector<16x128xf32>
    %215 = arith.maximumf %214, %213 : vector<16x128xf32>
    %216 = vector.broadcast %cst_114 : f32 to vector<16x128xf32>
    %217 = arith.minimumf %216, %215 : vector<16x128xf32>
    %c0_115 = arith.constant 0 : index
    %c13_116 = arith.constant 13 : index
    %218 = arith.index_cast %3 : i32 to index
    %c0_117 = arith.constant 0 : index
    %219 = vector.load %arg4[%c0_115, %c13_116, %218, %c0_117] : memref<1x14x32x128xf32, #tpu.memory_space<vmem>>, vector<1x1x16x128xf32>
    %220 = vector.shape_cast %219 : vector<1x1x16x128xf32> to vector<16x128xf32>
    %221 = vector.shape_cast %217 : vector<16x128xf32> to vector<1x1x16x128xf32>
    tpu.vector_store %arg4[%c0_115, %c13_116, %218, %c0_117], %221 {strides = array<i32>} : memref<1x14x32x128xf32, #tpu.memory_space<vmem>>, vector<1x1x16x128xf32>,
    %c1_i32_118 = arith.constant 1 : i32
    %c1_i32_119 = arith.constant 1 : i32
    %222 = arith.muli %c1_i32_118, %c1_i32_119 : i32
    %c0_i32_120 = arith.constant 0 : i32
    %223 = arith.addi %c0_i32_120, %222 : i32
    %c16_i32_121 = arith.constant 16 : i32
    %224 = arith.muli %223, %c16_i32_121 : i32
    %225 = tpu.assume_multiple %224, 16 : i32
    %c0_122 = arith.constant 0 : index
    %c0_123 = arith.constant 0 : index
    %226 = arith.index_cast %225 : i32 to index
    %c0_124 = arith.constant 0 : index
    %227 = vector.load %arg2[%c0_122, %c0_123, %226, %c0_124] : memref<1x4x32x128xf32, #tpu.memory_space<vmem>>, vector<1x1x16x128xf32>
    %228 = vector.shape_cast %227 : vector<1x1x16x128xf32> to vector<16x128xf32>
    %c0_125 = arith.constant 0 : index
    %c1_126 = arith.constant 1 : index
    %229 = arith.index_cast %225 : i32 to index
    %c0_127 = arith.constant 0 : index
    %230 = vector.load %arg2[%c0_125, %c1_126, %229, %c0_127] : memref<1x4x32x128xf32, #tpu.memory_space<vmem>>, vector<1x1x16x128xf32>
    %231 = vector.shape_cast %230 : vector<1x1x16x128xf32> to vector<16x128xf32>
    %c0_128 = arith.constant 0 : index
    %c2_129 = arith.constant 2 : index
    %232 = arith.index_cast %225 : i32 to index
    %c0_130 = arith.constant 0 : index
    %233 = vector.load %arg2[%c0_128, %c2_129, %232, %c0_130] : memref<1x4x32x128xf32, #tpu.memory_space<vmem>>, vector<1x1x16x128xf32>
    %234 = vector.shape_cast %233 : vector<1x1x16x128xf32> to vector<16x128xf32>
    %c0_131 = arith.constant 0 : index
    %c3_132 = arith.constant 3 : index
    %235 = arith.index_cast %225 : i32 to index
    %c0_133 = arith.constant 0 : index
    %236 = vector.load %arg2[%c0_131, %c3_132, %235, %c0_133] : memref<1x4x32x128xf32, #tpu.memory_space<vmem>>, vector<1x1x16x128xf32>
    %237 = vector.shape_cast %236 : vector<1x1x16x128xf32> to vector<16x128xf32>
    %238 = arith.subf %234, %228 : vector<16x128xf32>
    %239 = arith.subf %237, %231 : vector<16x128xf32>
    %cst_134 = arith.constant 5.000000e-01 : f32
    %240 = vector.broadcast %cst_134 : f32 to vector<16x128xf32>
    %241 = arith.mulf %240, %238 : vector<16x128xf32>
    %242 = arith.addf %228, %241 : vector<16x128xf32>
    %cst_135 = arith.constant 5.000000e-01 : f32
    %243 = vector.broadcast %cst_135 : f32 to vector<16x128xf32>
    %244 = arith.mulf %243, %239 : vector<16x128xf32>
    %245 = arith.addf %231, %244 : vector<16x128xf32>
    %cst_136 = arith.constant 1.000000e-01 : f32
    %246 = vector.broadcast %cst_136 : f32 to vector<16x128xf32>
    %247 = arith.mulf %246, %238 : vector<16x128xf32>
    %cst_137 = arith.constant 1.000000e-01 : f32
    %248 = vector.broadcast %cst_137 : f32 to vector<16x128xf32>
    %249 = arith.mulf %248, %239 : vector<16x128xf32>
    %c0_138 = arith.constant 0 : index
    %c0_139 = arith.constant 0 : index
    %250 = arith.index_cast %225 : i32 to index
    %c0_140 = arith.constant 0 : index
    %251 = vector.load %arg3[%c0_138, %c0_139, %250, %c0_140] : memref<1x14x32x128xf32, #tpu.memory_space<vmem>>, vector<1x1x16x128xf32>
    %252 = vector.shape_cast %251 : vector<1x1x16x128xf32> to vector<16x128xf32>
    %253 = arith.mulf %252, %247 : vector<16x128xf32>
    %254 = arith.addf %242, %253 : vector<16x128xf32>
    %c0_141 = arith.constant 0 : index
    %c1_142 = arith.constant 1 : index
    %255 = arith.index_cast %225 : i32 to index
    %c0_143 = arith.constant 0 : index
    %256 = vector.load %arg3[%c0_141, %c1_142, %255, %c0_143] : memref<1x14x32x128xf32, #tpu.memory_space<vmem>>, vector<1x1x16x128xf32>
    %257 = vector.shape_cast %256 : vector<1x1x16x128xf32> to vector<16x128xf32>
    %258 = arith.mulf %257, %249 : vector<16x128xf32>
    %259 = arith.addf %245, %258 : vector<16x128xf32>
    %cst_144 = arith.constant 5.000000e-01 : f32
    %260 = vector.broadcast %cst_144 : f32 to vector<16x128xf32>
    %261 = arith.mulf %260, %238 : vector<16x128xf32>
    %c0_145 = arith.constant 0 : index
    %c2_146 = arith.constant 2 : index
    %262 = arith.index_cast %225 : i32 to index
    %c0_147 = arith.constant 0 : index
    %263 = vector.load %arg3[%c0_145, %c2_146, %262, %c0_147] : memref<1x14x32x128xf32, #tpu.memory_space<vmem>>, vector<1x1x16x128xf32>
    %264 = vector.shape_cast %263 : vector<1x1x16x128xf32> to vector<16x128xf32>
    %cst_148 = arith.constant 2.000000e-01 : f32
    %265 = vector.broadcast %cst_148 : f32 to vector<16x128xf32>
    %266 = arith.mulf %265, %264 : vector<16x128xf32>
    %267 = math.exp %266 : vector<16x128xf32>
    %268 = arith.mulf %261, %267 : vector<16x128xf32>
    %cst_149 = arith.constant 5.000000e-01 : f32
    %269 = vector.broadcast %cst_149 : f32 to vector<16x128xf32>
    %270 = arith.mulf %269, %239 : vector<16x128xf32>
    %c0_150 = arith.constant 0 : index
    %c3_151 = arith.constant 3 : index
    %271 = arith.index_cast %225 : i32 to index
    %c0_152 = arith.constant 0 : index
    %272 = vector.load %arg3[%c0_150, %c3_151, %271, %c0_152] : memref<1x14x32x128xf32, #tpu.memory_space<vmem>>, vector<1x1x16x128xf32>
    %273 = vector.shape_cast %272 : vector<1x1x16x128xf32> to vector<16x128xf32>
    %cst_153 = arith.constant 2.000000e-01 : f32
    %274 = vector.broadcast %cst_153 : f32 to vector<16x128xf32>
    %275 = arith.mulf %274, %273 : vector<16x128xf32>
    %276 = math.exp %275 : vector<16x128xf32>
    %277 = arith.mulf %270, %276 : vector<16x128xf32>
    %278 = arith.subf %254, %268 : vector<16x128xf32>
    %cst_154 = arith.constant 0.000000e+00 : f32
    %cst_155 = arith.constant 3.200000e+01 : f32
    %279 = vector.broadcast %cst_154 : f32 to vector<16x128xf32>
    %280 = arith.maximumf %279, %278 : vector<16x128xf32>
    %281 = vector.broadcast %cst_155 : f32 to vector<16x128xf32>
    %282 = arith.minimumf %281, %280 : vector<16x128xf32>
    %c0_156 = arith.constant 0 : index
    %c0_157 = arith.constant 0 : index
    %283 = arith.index_cast %225 : i32 to index
    %c0_158 = arith.constant 0 : index
    %284 = vector.load %arg4[%c0_156, %c0_157, %283, %c0_158] : memref<1x14x32x128xf32, #tpu.memory_space<vmem>>, vector<1x1x16x128xf32>
    %285 = vector.shape_cast %284 : vector<1x1x16x128xf32> to vector<16x128xf32>
    %286 = vector.shape_cast %282 : vector<16x128xf32> to vector<1x1x16x128xf32>
    tpu.vector_store %arg4[%c0_156, %c0_157, %283, %c0_158], %286 {strides = array<i32>} : memref<1x14x32x128xf32, #tpu.memory_space<vmem>>, vector<1x1x16x128xf32>,
    %287 = arith.subf %259, %277 : vector<16x128xf32>
    %cst_159 = arith.constant 0.000000e+00 : f32
    %cst_160 = arith.constant 3.200000e+01 : f32
    %288 = vector.broadcast %cst_159 : f32 to vector<16x128xf32>
    %289 = arith.maximumf %288, %287 : vector<16x128xf32>
    %290 = vector.broadcast %cst_160 : f32 to vector<16x128xf32>
    %291 = arith.minimumf %290, %289 : vector<16x128xf32>
    %c0_161 = arith.constant 0 : index
    %c1_162 = arith.constant 1 : index
    %292 = arith.index_cast %225 : i32 to index
    %c0_163 = arith.constant 0 : index
    %293 = vector.load %arg4[%c0_161, %c1_162, %292, %c0_163] : memref<1x14x32x128xf32, #tpu.memory_space<vmem>>, vector<1x1x16x128xf32>
    %294 = vector.shape_cast %293 : vector<1x1x16x128xf32> to vector<16x128xf32>
    %295 = vector.shape_cast %291 : vector<16x128xf32> to vector<1x1x16x128xf32>
    tpu.vector_store %arg4[%c0_161, %c1_162, %292, %c0_163], %295 {strides = array<i32>} : memref<1x14x32x128xf32, #tpu.memory_space<vmem>>, vector<1x1x16x128xf32>,
    %296 = arith.addf %254, %268 : vector<16x128xf32>
    %cst_164 = arith.constant 0.000000e+00 : f32
    %cst_165 = arith.constant 3.200000e+01 : f32
    %297 = vector.broadcast %cst_164 : f32 to vector<16x128xf32>
    %298 = arith.maximumf %297, %296 : vector<16x128xf32>
    %299 = vector.broadcast %cst_165 : f32 to vector<16x128xf32>
    %300 = arith.minimumf %299, %298 : vector<16x128xf32>
    %c0_166 = arith.constant 0 : index
    %c2_167 = arith.constant 2 : index
    %301 = arith.index_cast %225 : i32 to index
    %c0_168 = arith.constant 0 : index
    %302 = vector.load %arg4[%c0_166, %c2_167, %301, %c0_168] : memref<1x14x32x128xf32, #tpu.memory_space<vmem>>, vector<1x1x16x128xf32>
    %303 = vector.shape_cast %302 : vector<1x1x16x128xf32> to vector<16x128xf32>
    %304 = vector.shape_cast %300 : vector<16x128xf32> to vector<1x1x16x128xf32>
    tpu.vector_store %arg4[%c0_166, %c2_167, %301, %c0_168], %304 {strides = array<i32>} : memref<1x14x32x128xf32, #tpu.memory_space<vmem>>, vector<1x1x16x128xf32>,
    %305 = arith.addf %259, %277 : vector<16x128xf32>
    %cst_169 = arith.constant 0.000000e+00 : f32
    %cst_170 = arith.constant 3.200000e+01 : f32
    %306 = vector.broadcast %cst_169 : f32 to vector<16x128xf32>
    %307 = arith.maximumf %306, %305 : vector<16x128xf32>
    %308 = vector.broadcast %cst_170 : f32 to vector<16x128xf32>
    %309 = arith.minimumf %308, %307 : vector<16x128xf32>
    %c0_171 = arith.constant 0 : index
    %c3_172 = arith.constant 3 : index
    %310 = arith.index_cast %225 : i32 to index
    %c0_173 = arith.constant 0 : index
    %311 = vector.load %arg4[%c0_171, %c3_172, %310, %c0_173] : memref<1x14x32x128xf32, #tpu.memory_space<vmem>>, vector<1x1x16x128xf32>
    %312 = vector.shape_cast %311 : vector<1x1x16x128xf32> to vector<16x128xf32>
    %313 = vector.shape_cast %309 : vector<16x128xf32> to vector<1x1x16x128xf32>
    tpu.vector_store %arg4[%c0_171, %c3_172, %310, %c0_173], %313 {strides = array<i32>} : memref<1x14x32x128xf32, #tpu.memory_space<vmem>>, vector<1x1x16x128xf32>,
    %c0_174 = arith.constant 0 : index
    %c4_175 = arith.constant 4 : index
    %314 = arith.index_cast %225 : i32 to index
    %c0_176 = arith.constant 0 : index
    %315 = vector.load %arg3[%c0_174, %c4_175, %314, %c0_176] : memref<1x14x32x128xf32, #tpu.memory_space<vmem>>, vector<1x1x16x128xf32>
    %316 = vector.shape_cast %315 : vector<1x1x16x128xf32> to vector<16x128xf32>
    %317 = arith.mulf %316, %247 : vector<16x128xf32>
    %318 = arith.addf %242, %317 : vector<16x128xf32>
    %cst_177 = arith.constant 0.000000e+00 : f32
    %cst_178 = arith.constant 3.200000e+01 : f32
    %319 = vector.broadcast %cst_177 : f32 to vector<16x128xf32>
    %320 = arith.maximumf %319, %318 : vector<16x128xf32>
    %321 = vector.broadcast %cst_178 : f32 to vector<16x128xf32>
    %322 = arith.minimumf %321, %320 : vector<16x128xf32>
    %c0_179 = arith.constant 0 : index
    %c4_180 = arith.constant 4 : index
    %323 = arith.index_cast %225 : i32 to index
    %c0_181 = arith.constant 0 : index
    %324 = vector.load %arg4[%c0_179, %c4_180, %323, %c0_181] : memref<1x14x32x128xf32, #tpu.memory_space<vmem>>, vector<1x1x16x128xf32>
    %325 = vector.shape_cast %324 : vector<1x1x16x128xf32> to vector<16x128xf32>
    %326 = vector.shape_cast %322 : vector<16x128xf32> to vector<1x1x16x128xf32>
    tpu.vector_store %arg4[%c0_179, %c4_180, %323, %c0_181], %326 {strides = array<i32>} : memref<1x14x32x128xf32, #tpu.memory_space<vmem>>, vector<1x1x16x128xf32>,
    %c0_182 = arith.constant 0 : index
    %c5_183 = arith.constant 5 : index
    %327 = arith.index_cast %225 : i32 to index
    %c0_184 = arith.constant 0 : index
    %328 = vector.load %arg3[%c0_182, %c5_183, %327, %c0_184] : memref<1x14x32x128xf32, #tpu.memory_space<vmem>>, vector<1x1x16x128xf32>
    %329 = vector.shape_cast %328 : vector<1x1x16x128xf32> to vector<16x128xf32>
    %330 = arith.mulf %329, %249 : vector<16x128xf32>
    %331 = arith.addf %245, %330 : vector<16x128xf32>
    %cst_185 = arith.constant 0.000000e+00 : f32
    %cst_186 = arith.constant 3.200000e+01 : f32
    %332 = vector.broadcast %cst_185 : f32 to vector<16x128xf32>
    %333 = arith.maximumf %332, %331 : vector<16x128xf32>
    %334 = vector.broadcast %cst_186 : f32 to vector<16x128xf32>
    %335 = arith.minimumf %334, %333 : vector<16x128xf32>
    %c0_187 = arith.constant 0 : index
    %c5_188 = arith.constant 5 : index
    %336 = arith.index_cast %225 : i32 to index
    %c0_189 = arith.constant 0 : index
    %337 = vector.load %arg4[%c0_187, %c5_188, %336, %c0_189] : memref<1x14x32x128xf32, #tpu.memory_space<vmem>>, vector<1x1x16x128xf32>
    %338 = vector.shape_cast %337 : vector<1x1x16x128xf32> to vector<16x128xf32>
    %339 = vector.shape_cast %335 : vector<16x128xf32> to vector<1x1x16x128xf32>
    tpu.vector_store %arg4[%c0_187, %c5_188, %336, %c0_189], %339 {strides = array<i32>} : memref<1x14x32x128xf32, #tpu.memory_space<vmem>>, vector<1x1x16x128xf32>,
    %c0_190 = arith.constant 0 : index
    %c6_191 = arith.constant 6 : index
    %340 = arith.index_cast %225 : i32 to index
    %c0_192 = arith.constant 0 : index
    %341 = vector.load %arg3[%c0_190, %c6_191, %340, %c0_192] : memref<1x14x32x128xf32, #tpu.memory_space<vmem>>, vector<1x1x16x128xf32>
    %342 = vector.shape_cast %341 : vector<1x1x16x128xf32> to vector<16x128xf32>
    %343 = arith.mulf %342, %247 : vector<16x128xf32>
    %344 = arith.addf %242, %343 : vector<16x128xf32>
    %cst_193 = arith.constant 0.000000e+00 : f32
    %cst_194 = arith.constant 3.200000e+01 : f32
    %345 = vector.broadcast %cst_193 : f32 to vector<16x128xf32>
    %346 = arith.maximumf %345, %344 : vector<16x128xf32>
    %347 = vector.broadcast %cst_194 : f32 to vector<16x128xf32>
    %348 = arith.minimumf %347, %346 : vector<16x128xf32>
    %c0_195 = arith.constant 0 : index
    %c6_196 = arith.constant 6 : index
    %349 = arith.index_cast %225 : i32 to index
    %c0_197 = arith.constant 0 : index
    %350 = vector.load %arg4[%c0_195, %c6_196, %349, %c0_197] : memref<1x14x32x128xf32, #tpu.memory_space<vmem>>, vector<1x1x16x128xf32>
    %351 = vector.shape_cast %350 : vector<1x1x16x128xf32> to vector<16x128xf32>
    %352 = vector.shape_cast %348 : vector<16x128xf32> to vector<1x1x16x128xf32>
    tpu.vector_store %arg4[%c0_195, %c6_196, %349, %c0_197], %352 {strides = array<i32>} : memref<1x14x32x128xf32, #tpu.memory_space<vmem>>, vector<1x1x16x128xf32>,
    %c0_198 = arith.constant 0 : index
    %c7_199 = arith.constant 7 : index
    %353 = arith.index_cast %225 : i32 to index
    %c0_200 = arith.constant 0 : index
    %354 = vector.load %arg3[%c0_198, %c7_199, %353, %c0_200] : memref<1x14x32x128xf32, #tpu.memory_space<vmem>>, vector<1x1x16x128xf32>
    %355 = vector.shape_cast %354 : vector<1x1x16x128xf32> to vector<16x128xf32>
    %356 = arith.mulf %355, %249 : vector<16x128xf32>
    %357 = arith.addf %245, %356 : vector<16x128xf32>
    %cst_201 = arith.constant 0.000000e+00 : f32
    %cst_202 = arith.constant 3.200000e+01 : f32
    %358 = vector.broadcast %cst_201 : f32 to vector<16x128xf32>
    %359 = arith.maximumf %358, %357 : vector<16x128xf32>
    %360 = vector.broadcast %cst_202 : f32 to vector<16x128xf32>
    %361 = arith.minimumf %360, %359 : vector<16x128xf32>
    %c0_203 = arith.constant 0 : index
    %c7_204 = arith.constant 7 : index
    %362 = arith.index_cast %225 : i32 to index
    %c0_205 = arith.constant 0 : index
    %363 = vector.load %arg4[%c0_203, %c7_204, %362, %c0_205] : memref<1x14x32x128xf32, #tpu.memory_space<vmem>>, vector<1x1x16x128xf32>
    %364 = vector.shape_cast %363 : vector<1x1x16x128xf32> to vector<16x128xf32>
    %365 = vector.shape_cast %361 : vector<16x128xf32> to vector<1x1x16x128xf32>
    tpu.vector_store %arg4[%c0_203, %c7_204, %362, %c0_205], %365 {strides = array<i32>} : memref<1x14x32x128xf32, #tpu.memory_space<vmem>>, vector<1x1x16x128xf32>,
    %c0_206 = arith.constant 0 : index
    %c8_207 = arith.constant 8 : index
    %366 = arith.index_cast %225 : i32 to index
    %c0_208 = arith.constant 0 : index
    %367 = vector.load %arg3[%c0_206, %c8_207, %366, %c0_208] : memref<1x14x32x128xf32, #tpu.memory_space<vmem>>, vector<1x1x16x128xf32>
    %368 = vector.shape_cast %367 : vector<1x1x16x128xf32> to vector<16x128xf32>
    %369 = arith.mulf %368, %247 : vector<16x128xf32>
    %370 = arith.addf %242, %369 : vector<16x128xf32>
    %cst_209 = arith.constant 0.000000e+00 : f32
    %cst_210 = arith.constant 3.200000e+01 : f32
    %371 = vector.broadcast %cst_209 : f32 to vector<16x128xf32>
    %372 = arith.maximumf %371, %370 : vector<16x128xf32>
    %373 = vector.broadcast %cst_210 : f32 to vector<16x128xf32>
    %374 = arith.minimumf %373, %372 : vector<16x128xf32>
    %c0_211 = arith.constant 0 : index
    %c8_212 = arith.constant 8 : index
    %375 = arith.index_cast %225 : i32 to index
    %c0_213 = arith.constant 0 : index
    %376 = vector.load %arg4[%c0_211, %c8_212, %375, %c0_213] : memref<1x14x32x128xf32, #tpu.memory_space<vmem>>, vector<1x1x16x128xf32>
    %377 = vector.shape_cast %376 : vector<1x1x16x128xf32> to vector<16x128xf32>
    %378 = vector.shape_cast %374 : vector<16x128xf32> to vector<1x1x16x128xf32>
    tpu.vector_store %arg4[%c0_211, %c8_212, %375, %c0_213], %378 {strides = array<i32>} : memref<1x14x32x128xf32, #tpu.memory_space<vmem>>, vector<1x1x16x128xf32>,
    %c0_214 = arith.constant 0 : index
    %c9_215 = arith.constant 9 : index
    %379 = arith.index_cast %225 : i32 to index
    %c0_216 = arith.constant 0 : index
    %380 = vector.load %arg3[%c0_214, %c9_215, %379, %c0_216] : memref<1x14x32x128xf32, #tpu.memory_space<vmem>>, vector<1x1x16x128xf32>
    %381 = vector.shape_cast %380 : vector<1x1x16x128xf32> to vector<16x128xf32>
    %382 = arith.mulf %381, %249 : vector<16x128xf32>
    %383 = arith.addf %245, %382 : vector<16x128xf32>
    %cst_217 = arith.constant 0.000000e+00 : f32
    %cst_218 = arith.constant 3.200000e+01 : f32
    %384 = vector.broadcast %cst_217 : f32 to vector<16x128xf32>
    %385 = arith.maximumf %384, %383 : vector<16x128xf32>
    %386 = vector.broadcast %cst_218 : f32 to vector<16x128xf32>
    %387 = arith.minimumf %386, %385 : vector<16x128xf32>
    %c0_219 = arith.constant 0 : index
    %c9_220 = arith.constant 9 : index
    %388 = arith.index_cast %225 : i32 to index
    %c0_221 = arith.constant 0 : index
    %389 = vector.load %arg4[%c0_219, %c9_220, %388, %c0_221] : memref<1x14x32x128xf32, #tpu.memory_space<vmem>>, vector<1x1x16x128xf32>
    %390 = vector.shape_cast %389 : vector<1x1x16x128xf32> to vector<16x128xf32>
    %391 = vector.shape_cast %387 : vector<16x128xf32> to vector<1x1x16x128xf32>
    tpu.vector_store %arg4[%c0_219, %c9_220, %388, %c0_221], %391 {strides = array<i32>} : memref<1x14x32x128xf32, #tpu.memory_space<vmem>>, vector<1x1x16x128xf32>,
    %c0_222 = arith.constant 0 : index
    %c10_223 = arith.constant 10 : index
    %392 = arith.index_cast %225 : i32 to index
    %c0_224 = arith.constant 0 : index
    %393 = vector.load %arg3[%c0_222, %c10_223, %392, %c0_224] : memref<1x14x32x128xf32, #tpu.memory_space<vmem>>, vector<1x1x16x128xf32>
    %394 = vector.shape_cast %393 : vector<1x1x16x128xf32> to vector<16x128xf32>
    %395 = arith.mulf %394, %247 : vector<16x128xf32>
    %396 = arith.addf %242, %395 : vector<16x128xf32>
    %cst_225 = arith.constant 0.000000e+00 : f32
    %cst_226 = arith.constant 3.200000e+01 : f32
    %397 = vector.broadcast %cst_225 : f32 to vector<16x128xf32>
    %398 = arith.maximumf %397, %396 : vector<16x128xf32>
    %399 = vector.broadcast %cst_226 : f32 to vector<16x128xf32>
    %400 = arith.minimumf %399, %398 : vector<16x128xf32>
    %c0_227 = arith.constant 0 : index
    %c10_228 = arith.constant 10 : index
    %401 = arith.index_cast %225 : i32 to index
    %c0_229 = arith.constant 0 : index
    %402 = vector.load %arg4[%c0_227, %c10_228, %401, %c0_229] : memref<1x14x32x128xf32, #tpu.memory_space<vmem>>, vector<1x1x16x128xf32>
    %403 = vector.shape_cast %402 : vector<1x1x16x128xf32> to vector<16x128xf32>
    %404 = vector.shape_cast %400 : vector<16x128xf32> to vector<1x1x16x128xf32>
    tpu.vector_store %arg4[%c0_227, %c10_228, %401, %c0_229], %404 {strides = array<i32>} : memref<1x14x32x128xf32, #tpu.memory_space<vmem>>, vector<1x1x16x128xf32>,
    %c0_230 = arith.constant 0 : index
    %c11_231 = arith.constant 11 : index
    %405 = arith.index_cast %225 : i32 to index
    %c0_232 = arith.constant 0 : index
    %406 = vector.load %arg3[%c0_230, %c11_231, %405, %c0_232] : memref<1x14x32x128xf32, #tpu.memory_space<vmem>>, vector<1x1x16x128xf32>
    %407 = vector.shape_cast %406 : vector<1x1x16x128xf32> to vector<16x128xf32>
    %408 = arith.mulf %407, %249 : vector<16x128xf32>
    %409 = arith.addf %245, %408 : vector<16x128xf32>
    %cst_233 = arith.constant 0.000000e+00 : f32
    %cst_234 = arith.constant 3.200000e+01 : f32
    %410 = vector.broadcast %cst_233 : f32 to vector<16x128xf32>
    %411 = arith.maximumf %410, %409 : vector<16x128xf32>
    %412 = vector.broadcast %cst_234 : f32 to vector<16x128xf32>
    %413 = arith.minimumf %412, %411 : vector<16x128xf32>
    %c0_235 = arith.constant 0 : index
    %c11_236 = arith.constant 11 : index
    %414 = arith.index_cast %225 : i32 to index
    %c0_237 = arith.constant 0 : index
    %415 = vector.load %arg4[%c0_235, %c11_236, %414, %c0_237] : memref<1x14x32x128xf32, #tpu.memory_space<vmem>>, vector<1x1x16x128xf32>
    %416 = vector.shape_cast %415 : vector<1x1x16x128xf32> to vector<16x128xf32>
    %417 = vector.shape_cast %413 : vector<16x128xf32> to vector<1x1x16x128xf32>
    tpu.vector_store %arg4[%c0_235, %c11_236, %414, %c0_237], %417 {strides = array<i32>} : memref<1x14x32x128xf32, #tpu.memory_space<vmem>>, vector<1x1x16x128xf32>,
    %c0_238 = arith.constant 0 : index
    %c12_239 = arith.constant 12 : index
    %418 = arith.index_cast %225 : i32 to index
    %c0_240 = arith.constant 0 : index
    %419 = vector.load %arg3[%c0_238, %c12_239, %418, %c0_240] : memref<1x14x32x128xf32, #tpu.memory_space<vmem>>, vector<1x1x16x128xf32>
    %420 = vector.shape_cast %419 : vector<1x1x16x128xf32> to vector<16x128xf32>
    %421 = arith.mulf %420, %247 : vector<16x128xf32>
    %422 = arith.addf %242, %421 : vector<16x128xf32>
    %cst_241 = arith.constant 0.000000e+00 : f32
    %cst_242 = arith.constant 3.200000e+01 : f32
    %423 = vector.broadcast %cst_241 : f32 to vector<16x128xf32>
    %424 = arith.maximumf %423, %422 : vector<16x128xf32>
    %425 = vector.broadcast %cst_242 : f32 to vector<16x128xf32>
    %426 = arith.minimumf %425, %424 : vector<16x128xf32>
    %c0_243 = arith.constant 0 : index
    %c12_244 = arith.constant 12 : index
    %427 = arith.index_cast %225 : i32 to index
    %c0_245 = arith.constant 0 : index
    %428 = vector.load %arg4[%c0_243, %c12_244, %427, %c0_245] : memref<1x14x32x128xf32, #tpu.memory_space<vmem>>, vector<1x1x16x128xf32>
    %429 = vector.shape_cast %428 : vector<1x1x16x128xf32> to vector<16x128xf32>
    %430 = vector.shape_cast %426 : vector<16x128xf32> to vector<1x1x16x128xf32>
    tpu.vector_store %arg4[%c0_243, %c12_244, %427, %c0_245], %430 {strides = array<i32>} : memref<1x14x32x128xf32, #tpu.memory_space<vmem>>, vector<1x1x16x128xf32>,
    %c0_246 = arith.constant 0 : index
    %c13_247 = arith.constant 13 : index
    %431 = arith.index_cast %225 : i32 to index
    %c0_248 = arith.constant 0 : index
    %432 = vector.load %arg3[%c0_246, %c13_247, %431, %c0_248] : memref<1x14x32x128xf32, #tpu.memory_space<vmem>>, vector<1x1x16x128xf32>
    %433 = vector.shape_cast %432 : vector<1x1x16x128xf32> to vector<16x128xf32>
    %434 = arith.mulf %433, %249 : vector<16x128xf32>
    %435 = arith.addf %245, %434 : vector<16x128xf32>
    %cst_249 = arith.constant 0.000000e+00 : f32
    %cst_250 = arith.constant 3.200000e+01 : f32
    %436 = vector.broadcast %cst_249 : f32 to vector<16x128xf32>
    %437 = arith.maximumf %436, %435 : vector<16x128xf32>
    %438 = vector.broadcast %cst_250 : f32 to vector<16x128xf32>
    %439 = arith.minimumf %438, %437 : vector<16x128xf32>
    %c0_251 = arith.constant 0 : index
    %c13_252 = arith.constant 13 : index
    %440 = arith.index_cast %225 : i32 to index
    %c0_253 = arith.constant 0 : index
    %441 = vector.load %arg4[%c0_251, %c13_252, %440, %c0_253] : memref<1x14x32x128xf32, #tpu.memory_space<vmem>>, vector<1x1x16x128xf32>
    %442 = vector.shape_cast %441 : vector<1x1x16x128xf32> to vector<16x128xf32>
    %443 = vector.shape_cast %439 : vector<16x128xf32> to vector<1x1x16x128xf32>
    tpu.vector_store %arg4[%c0_251, %c13_252, %440, %c0_253], %443 {strides = array<i32>} : memref<1x14x32x128xf32, #tpu.memory_space<vmem>>, vector<1x1x16x128xf32>,
    %c2_i32 = arith.constant 2 : i32
    return
  }
  func.func @transform_0(%arg0: i32, %arg1: i32) -> (i32, i32, i32, i32) {
    %c0_i32 = arith.constant 0 : i32
    %c0_i32_0 = arith.constant 0 : i32
    %c0_i32_1 = arith.constant 0 : i32
    return %arg0, %c0_i32, %arg1, %c0_i32_0 : i32, i32, i32, i32
  }
  func.func @transform_1(%arg0: i32, %arg1: i32) -> (i32, i32, i32, i32) {
    %c0_i32 = arith.constant 0 : i32
    %c0_i32_0 = arith.constant 0 : i32
    %c0_i32_1 = arith.constant 0 : i32
    return %arg0, %c0_i32, %arg1, %c0_i32_0 : i32, i32, i32, i32
  }
  func.func @transform_2(%arg0: i32, %arg1: i32) -> (i32, i32, i32, i32) {
    %c0_i32 = arith.constant 0 : i32
    %c0_i32_0 = arith.constant 0 : i32
    %c0_i32_1 = arith.constant 0 : i32
    return %arg0, %c0_i32, %arg1, %c0_i32_0 : i32, i32, i32, i32
  }
}

</mosaic_0001>

<llo_original>
// kernel: tpu_custom_call.1
$region0: #{tpu_custom_call.1}
  #allocation0 [shape = 'u32[]', space=smem, size = 0x4, offset = 0x4, fixed_abs, tag = 'smem constant byte address 0x4 - core index']
  #allocation1 [shape = 'u32[72,128]{1,0:T(1,128)}', space=vmem, size = 0x9000, scoped, tag = 'internal scratch']
  %s0 = inlined_call_operand.hbm [shape: f32[2,4,32,128], index: 0, kind: input, shape index: {}]
  %s1 = inlined_call_operand.hbm [shape: f32[2,14,32,128], index: 1, kind: input, shape index: {}]
  %s2 = inlined_call_operand.hbm [shape: f32[2,14,32,128], index: 2, kind: output, shape index: {}]
  %s3 = sld [smem:[#allocation0]]
  $region49: #{tpu_custom_call.1} parent=0
    _
  %s5 = ssub.s32 1, %s3
  %s6 = scalar_select 0, %s5, %s3
  $region1: #{tpu_custom_call.1} parent=0
    #allocation2 [shape = 'u8[131072]{0}', space=vmem, size = 0x20000, scoped, tag = 'input window, operand 0']
    #allocation3 [shape = 's32[2]{0}', space=sflag, size = 0x8, scoped, tag = 'scoped memory for tpu_custom_call.1']
    #allocation4 [shape = 's32[2]{0}', space=sflag, size = 0x8, scoped, tag = 'scoped memory for tpu_custom_call.1']
    #allocation5 [shape = 'u8[458752]{0}', space=vmem, size = 0x70000, scoped, tag = 'input window, operand 1']
    #allocation6 [shape = 's32[2]{0}', space=sflag, size = 0x8, scoped, tag = 'scoped memory for tpu_custom_call.1']
    #allocation7 [shape = 'u8[458752]{0}', space=vmem, size = 0x70000, scoped, tag = 'output window, operand 0']
    %7 = vsyncpa [#allocation3], 0
    %s8 = scalar_lea.sflag [#allocation3], 1
    %9 = vsyncpa %s8, 0
    %10 = vsyncpa [#allocation6], 0
    %s11 = scalar_lea.sflag [#allocation6], 1
    %12 = vsyncpa %s11, 0
    %13 = vsyncpa [#allocation4], 0
    %s14 = scalar_lea.sflag [#allocation4], 1
    %15 = vsyncpa %s14, 0
    loop: start=0, step=1, limit=4
    $region2: #{tpu_custom_call.1} parent=1 // loop_pre_header
      _
    $region3: #{tpu_custom_call.1} parent=1 // loop_header
      %s17 = sphi 0, %s21
      %p18 = scmp.ge.s32.totalorder %s17, 4
      %s24 = sphi 0, %s36
      %s25 = sphi 0, %s32
      %s26 = sphi 0, %s24
      %s27 = sphi 0, %s25
      %s28 = sphi 0, %s26
      %s29 = sphi 0, %s27
      %s41 = sphi 0, %s43
      %s44 = sphi 0, %s41
      %s45 = sphi 0, %s44
      %s61 = sphi 0, %s45
      %s69 = sphi 0, %s71
      %s72 = sphi 0, %s69
      %s73 = sphi 0, %s72
      %s89 = sphi 0, %s73
      %s97 = sphi 0, %s99
      %s100 = sphi 0, %s97
      %s101 = sphi 0, %s100
      %s117 = sphi 0, %s101
    $region4: #{tpu_custom_call.1} parent=1 // loop_header_branch
      %20 = sbr.rel (%p18) target = $region8
    $region5: #{tpu_custom_call.1} parent=1 // loop_body
      %s22 = ssub.s32 %s17, 1
      %s23 = ssub.s32 %s17, 2
      %s30 = sadd.s32 1, %s25
      %p31 = scmp.ge.s32.totalorder %s30, 1
      %s32 = scalar_select %p31, 0, %s30
      %s33 = sadd.s32 1, %s24
      %s34 = scalar_select %p31, %s33, %s24
      %p35 = scmp.ge.s32.totalorder %s34, 2
      %s36 = scalar_select %p35, 0, %s34
      %s37 = ssub.s32 %s24, %s36
      %s38 = ssub.s32 %s25, %s32
      %s39 = sor.u32 %s37, %s38
      %p40 = scmp.eq.s32.totalorder %s39, 0
      %s42 = sadd.s32 %s41, 1
      %s43 = scalar_select %p40, %s41, %s42
      %p46 = pneg %p40
      %p47 = scmp.eq.s32.totalorder %s17, 1
      %p48 = por %p46, %p47
      %p49 = scmp.ne.s32.totalorder %s41, %s44
      %p50 = scmp.eq.s32.totalorder %s17, 0
      %p51 = por %p49, %p50
      %p52 = scmp.ne.s32.totalorder %s41, %s44
      %p53 = scmp.eq.s32.totalorder %s22, 1
      %p54 = por %p52, %p53
      %p55 = scmp.ne.s32.totalorder %s44, %s45
      %p56 = scmp.eq.s32.totalorder %s22, 0
      %p57 = por %p55, %p56
      %p58 = scmp.ne.s32.totalorder %s44, %s45
      %p59 = scmp.eq.s32.totalorder %s23, 1
      %p60 = por %p58, %p59
      %p62 = scmp.ne.s32.totalorder %s45, %s61
      %p63 = scmp.eq.s32.totalorder %s23, 0
      %p64 = por %p62, %p63
      %s65 = ssub.s32 %s24, %s36
      %s66 = ssub.s32 %s25, %s32
      %s67 = sor.u32 %s65, %s66
      %p68 = scmp.eq.s32.totalorder %s67, 0
      %s70 = sadd.s32 %s69, 1
      %s71 = scalar_select %p68, %s69, %s70
      %p74 = pneg %p68
      %p75 = scmp.eq.s32.totalorder %s17, 1
      %p76 = por %p74, %p75
      %p77 = scmp.ne.s32.totalorder %s69, %s72
      %p78 = scmp.eq.s32.totalorder %s17, 0
      %p79 = por %p77, %p78
      %p80 = scmp.ne.s32.totalorder %s69, %s72
      %p81 = scmp.eq.s32.totalorder %s22, 1
      %p82 = por %p80, %p81
      %p83 = scmp.ne.s32.totalorder %s72, %s73
      %p84 = scmp.eq.s32.totalorder %s22, 0
      %p85 = por %p83, %p84
      %p86 = scmp.ne.s32.totalorder %s72, %s73
      %p87 = scmp.eq.s32.totalorder %s23, 1
      %p88 = por %p86, %p87
      %p90 = scmp.ne.s32.totalorder %s73, %s89
      %p91 = scmp.eq.s32.totalorder %s23, 0
      %p92 = por %p90, %p91
      %s93 = ssub.s32 %s24, %s36
      %s94 = ssub.s32 %s25, %s32
      %s95 = sor.u32 %s93, %s94
      %p96 = scmp.eq.s32.totalorder %s95, 0
      %s98 = sadd.s32 %s97, 1
      %s99 = scalar_select %p96, %s97, %s98
      %p102 = pneg %p96
      %p103 = scmp.eq.s32.totalorder %s17, 1
      %p104 = por %p102, %p103
      %p105 = scmp.ne.s32.totalorder %s97, %s100
      %p106 = scmp.eq.s32.totalorder %s17, 0
      %p107 = por %p105, %p106
      %p108 = scmp.ne.s32.totalorder %s97, %s100
      %p109 = scmp.eq.s32.totalorder %s22, 1
      %p110 = por %p108, %p109
      %p111 = scmp.ne.s32.totalorder %s100, %s101
      %p112 = scmp.eq.s32.totalorder %s22, 0
      %p113 = por %p111, %p112
      %p114 = scmp.ne.s32.totalorder %s100, %s101
      %p115 = scmp.eq.s32.totalorder %s23, 1
      %p116 = por %p114, %p115
      %p118 = scmp.ne.s32.totalorder %s101, %s117
      %p119 = scmp.eq.s32.totalorder %s23, 0
      %p120 = por %p118, %p119
      %p121 = scmp.le.s32.totalorder 1, %s17
      %p122 = scmp.lt.s32.totalorder %s17, 3
      %p123 = pnand %p121, %p122
      %p124 = pneg %p123
      // Predicated region
      $region9: #{tpu_custom_call.1} parent=5 // pred_check
        _
      $region10: #{tpu_custom_call.1} parent=5 // pred_check_branch
        %126 = sbr.rel (%p123) target = $region12
      $region11: #{tpu_custom_call.1} parent=5 // pred_region
        %s127 = ssub.s32 %s17, 1
      $region12: #{tpu_custom_call.1} parent=5 // pred_fallthru
        _
      %p128 = scmp.lt.s32.totalorder %s17, 2
      // Predicated region
      $region13: #{tpu_custom_call.1} parent=5 // pred_check
        %p129 = pneg %p128
      $region14: #{tpu_custom_call.1} parent=5 // pred_check_branch
        %131 = sbr.rel (%p129) target = $region16
      $region15: #{tpu_custom_call.1} parent=5 // pred_region
        // Predicated region
        $region17: #{tpu_custom_call.1} parent=15 // pred_check
          %p132 = pneg %p51
        $region18: #{tpu_custom_call.1} parent=15 // pred_check_branch
          %134 = sbr.rel (%p132) target = $region20
        $region19: #{tpu_custom_call.1} parent=15 // pred_region
          %s135 = sand.u32 %s41, 1
          %s136 = scalar_lea.sflag [#allocation3], %s135
          %s137 = sand.u32 %s41, 1
          %s138 = smul.addr %s137, 128
          %s139 = scalar_lea.vmem [#allocation2], %s138
          %s140 = smul.u32 4, %s25
          %142 = vsyncadd %s136, 0
          %s143 = smul.addr %s24, 16
          %s144 = sadd.s32 %s140, %s143
          %s145 = smul.addr %s144, 8
          %s146 = scalar_lea.hbm %s0, %s145
          %s147 = sshll.u32 %s146, 4
          %s148 = int_to_ptr.hbm [resolvable:$true] %s147
          %s149 = sshll.u32 %s139, 4
          %s150 = int_to_ptr.vmem [resolvable:$true] %s149
          %155 = dma.hbm_to_vmem [thread:$0]  %s148, 2048, %s150, %s136, 128, 128, 8
        $region20: #{tpu_custom_call.1} parent=15 // pred_fallthru
          _
        // Predicated region
        $region21: #{tpu_custom_call.1} parent=15 // pred_check
          %p156 = pneg %p79
        $region22: #{tpu_custom_call.1} parent=15 // pred_check_branch
          %158 = sbr.rel (%p156) target = $region24
        $region23: #{tpu_custom_call.1} parent=15 // pred_region
          %s159 = sand.u32 %s69, 1
          %s160 = scalar_lea.sflag [#allocation6], %s159
          %s161 = sand.u32 %s69, 1
          %s162 = smul.addr %s161, 448
          %s163 = scalar_lea.vmem [#allocation5], %s162
          %s164 = smul.u32 4, %s25
          %166 = vsyncadd %s160, 0
          %s167 = smul.addr %s24, 56
          %s168 = sadd.s32 %s164, %s167
          %s169 = smul.addr %s168, 8
          %s170 = scalar_lea.hbm %s1, %s169
          %s171 = sshll.u32 %s170, 4
          %s172 = int_to_ptr.hbm [resolvable:$true] %s171
          %s173 = sshll.u32 %s163, 4
          %s174 = int_to_ptr.vmem [resolvable:$true] %s173
          %179 = dma.hbm_to_vmem [thread:$0]  %s172, 7168, %s174, %s160, 128, 128, 8
        $region24: #{tpu_custom_call.1} parent=15 // pred_fallthru
          _
      $region16: #{tpu_custom_call.1} parent=5 // pred_fallthru
        _
      %p180 = scmp.le.s32.totalorder 1, %s17
      %p181 = scmp.lt.s32.totalorder %s17, 3
      %p182 = pnand %p180, %p181
      %p183 = pneg %p182
      // Predicated region
      $region25: #{tpu_custom_call.1} parent=5 // pred_check
        _
      $region26: #{tpu_custom_call.1} parent=5 // pred_check_branch
        %185 = sbr.rel (%p182) target = $region28
      $region27: #{tpu_custom_call.1} parent=5 // pred_region
        %s186 = ssub.s32 %s17, 1
        %s187 = sand.u32 %s44, 1
        %s188 = scalar_lea.sflag [#allocation3], %s187
        %s189 = sand.u32 %s44, 1
        %s190 = smul.addr %s189, 128
        %s191 = scalar_lea.vmem [#allocation2], %s190
        // Predicated region
        $region29: #{tpu_custom_call.1} parent=27 // pred_check
          %p192 = pneg %p57
        $region30: #{tpu_custom_call.1} parent=27 // pred_check_branch
          %194 = sbr.rel (%p192) target = $region32
        $region31: #{tpu_custom_call.1} parent=27 // pred_region
          %196 = dma.done %s188, 2048
        $region32: #{tpu_custom_call.1} parent=27 // pred_fallthru
          _
        %s197 = sand.u32 %s72, 1
        %s198 = scalar_lea.sflag [#allocation6], %s197
        %s199 = sand.u32 %s72, 1
        %s200 = smul.addr %s199, 448
        %s201 = scalar_lea.vmem [#allocation5], %s200
        // Predicated region
        $region33: #{tpu_custom_call.1} parent=27 // pred_check
          %p202 = pneg %p85
        $region34: #{tpu_custom_call.1} parent=27 // pred_check_branch
          %204 = sbr.rel (%p202) target = $region36
        $region35: #{tpu_custom_call.1} parent=27 // pred_region
          %206 = dma.done %s198, 7168
        $region36: #{tpu_custom_call.1} parent=27 // pred_fallthru
          _
        %s207 = sand.u32 %s44, 1
        %s208 = scalar_lea.sflag [#allocation3], %s207
        %s209 = sand.u32 %s44, 1
        %s210 = smul.addr %s209, 128
        %s211 = scalar_lea.vmem [#allocation2], %s210
        %p212 = pneg %p57
        %p213 = pneg %p54
        %s214 = sand.u32 %s72, 1
        %s215 = scalar_lea.sflag [#allocation6], %s214
        %s216 = sand.u32 %s72, 1
        %s217 = smul.addr %s216, 448
        %s218 = scalar_lea.vmem [#allocation5], %s217
        %p219 = pneg %p85
        %p220 = pneg %p82
        %p221 = pneg %p113
        %p222 = pneg %p110
        %s223 = sand.u32 %s100, 1
        %s224 = scalar_lea.sflag [#allocation4], %s223
        %s225 = sand.u32 %s100, 1
        %s226 = smul.addr %s225, 448
        %s227 = scalar_lea.vmem [#allocation7], %s226
        %s228 = smul.u32 4, %s27
        %s229 = smul.u32 4, %s27
        %s230 = smul.u32 4, %s27
        %v231 = vld [vmem:[%s191] sm:$0xff]
        %v232 = vld [vmem:[%s191 + $0x8] sm:$0xff]
        %s233 = sadd.s32 0, 32
        %s234 = scalar_lea.vmem %s191, %s233 [#allocation2]
        %v235 = vld [vmem:[%s234] sm:$0xff]
        %v236 = vld [vmem:[%s234 + $0x8] sm:$0xff]
        %s237 = sadd.s32 0, 64
        %s238 = scalar_lea.vmem %s191, %s237 [#allocation2]
        %v239 = vld [vmem:[%s238] sm:$0xff]
        %v240 = vld [vmem:[%s238 + $0x8] sm:$0xff]
        %s241 = sadd.s32 0, 96
        %s242 = scalar_lea.vmem %s191, %s241 [#allocation2]
        %v243 = vld [vmem:[%s242] sm:$0xff]
        %v244 = vld [vmem:[%s242 + $0x8] sm:$0xff]
        %v245 = vsub.f32 %v239, %v231
        %v246 = vsub.f32 %v240, %v232
        %v247 = vsub.f32 %v243, %v235
        %v248 = vsub.f32 %v244, %v236
        %v249 = vmul.f32 %v245, 0.5
        %v250 = vmul.f32 %v246, 0.5
        %v251 = vadd.f32 %v231, %v249
        %v252 = vadd.f32 %v232, %v250
        %v253 = vmul.f32 %v247, 0.5
        %v254 = vmul.f32 %v248, 0.5
        %v255 = vadd.f32 %v235, %v253
        %v256 = vadd.f32 %v236, %v254
        %v257 = vmul.f32 %v245, 0.1
        %v258 = vmul.f32 %v246, 0.1
        %v259 = vmul.f32 %v247, 0.1
        %v260 = vmul.f32 %v248, 0.1
        %v261 = vld [vmem:[%s201] sm:$0xff]
        %v262 = vld [vmem:[%s201 + $0x8] sm:$0xff]
        %v263 = vmul.f32 %v261, %v257
        %v264 = vmul.f32 %v262, %v258
        %v265 = vadd.f32 %v251, %v263
        %v266 = vadd.f32 %v252, %v264
        %s267 = scalar_lea.vmem %s201, %s233 [#allocation5]
        %v268 = vld [vmem:[%s267] sm:$0xff]
        %v269 = vld [vmem:[%s267 + $0x8] sm:$0xff]
        %v270 = vmul.f32 %v268, %v259
        %v271 = vmul.f32 %v269, %v260
        %v272 = vadd.f32 %v255, %v270
        %v273 = vadd.f32 %v256, %v271
        %s274 = scalar_lea.vmem %s201, %s237 [#allocation5]
        %v275 = vld [vmem:[%s274] sm:$0xff]
        %v276 = vld [vmem:[%s274 + $0x8] sm:$0xff]
        %v277 = vmul.f32 %v275, 0.2
        %v278 = vmul.f32 %v276, 0.2
        %v279 = vmul.f32 %v277, 1.442695
        %v280 = vpow.pop %v279
        %v281 = vmul.f32 %v278, 1.442695
        %v282 = vpow.pop %v281
        %v283 = vmul.f32 %v249, %v280
        %v284 = vmul.f32 %v250, %v282
        %s285 = scalar_lea.vmem %s201, %s241 [#allocation5]
        %v286 = vld [vmem:[%s285] sm:$0xff]
        %v287 = vld [vmem:[%s285 + $0x8] sm:$0xff]
        %v288 = vmul.f32 %v286, 0.2
        %v289 = vmul.f32 %v287, 0.2
        %v290 = vmul.f32 %v288, 1.442695
        %v291 = vpow.pop %v290
        %v292 = vmul.f32 %v289, 1.442695
        %v293 = vpow.pop %v292
        %v294 = vmul.f32 %v253, %v291
        %v295 = vmul.f32 %v254, %v293
        %v296 = vsub.f32 %v265, %v283
        %v297 = vsub.f32 %v266, %v284
        %v298 = vmax.f32 %v296, 0.0
        %v299 = vmax.f32 %v297, 0.0
        %v300 = vmin.f32 %v298, 32.0
        %v301 = vmin.f32 %v299, 32.0
        %302 = vst [vmem:[%s227] sm:$0xff] %v300
        %303 = vst [vmem:[%s227 + $0x8] sm:$0xff] %v301
        %v304 = vsub.f32 %v272, %v294
        %v305 = vsub.f32 %v273, %v295
        %v306 = vmax.f32 %v304, 0.0
        %v307 = vmax.f32 %v305, 0.0
        %v308 = vmin.f32 %v306, 32.0
        %v309 = vmin.f32 %v307, 32.0
        %s310 = scalar_lea.vmem %s227, %s233 [#allocation7]
        %311 = vst [vmem:[%s310] sm:$0xff] %v308
        %312 = vst [vmem:[%s310 + $0x8] sm:$0xff] %v309
        %v313 = vadd.f32 %v265, %v283
        %v314 = vadd.f32 %v266, %v284
        %v315 = vmax.f32 %v313, 0.0
        %v316 = vmax.f32 %v314, 0.0
        %v317 = vmin.f32 %v315, 32.0
        %v318 = vmin.f32 %v316, 32.0
        %s319 = scalar_lea.vmem %s227, %s237 [#allocation7]
        %320 = vst [vmem:[%s319] sm:$0xff] %v317
        %321 = vst [vmem:[%s319 + $0x8] sm:$0xff] %v318
        %v322 = vadd.f32 %v272, %v294
        %v323 = vadd.f32 %v273, %v295
        %v324 = vmax.f32 %v322, 0.0
        %v325 = vmax.f32 %v323, 0.0
        %v326 = vmin.f32 %v324, 32.0
        %v327 = vmin.f32 %v325, 32.0
        %s328 = scalar_lea.vmem %s227, %s241 [#allocation7]
        %329 = vst [vmem:[%s328] sm:$0xff] %v326
        %330 = vst [vmem:[%s328 + $0x8] sm:$0xff] %v327
        %s331 = sadd.s32 0, 128
        %s332 = scalar_lea.vmem %s201, %s331 [#allocation5]
        %v333 = vld [vmem:[%s332] sm:$0xff]
        %v334 = vld [vmem:[%s332 + $0x8] sm:$0xff]
        %v335 = vmul.f32 %v333, %v257
        %v336 = vmul.f32 %v334, %v258
        %v337 = vadd.f32 %v251, %v335
        %v338 = vadd.f32 %v252, %v336
        %v339 = vmax.f32 %v337, 0.0
        %v340 = vmax.f32 %v338, 0.0
        %v341 = vmin.f32 %v339, 32.0
        %v342 = vmin.f32 %v340, 32.0
        %s343 = scalar_lea.vmem %s227, %s331 [#allocation7]
        %344 = vst [vmem:[%s343] sm:$0xff] %v341
        %345 = vst [vmem:[%s343 + $0x8] sm:$0xff] %v342
        %s346 = sadd.s32 0, 160
        %s347 = scalar_lea.vmem %s201, %s346 [#allocation5]
        %v348 = vld [vmem:[%s347] sm:$0xff]
        %v349 = vld [vmem:[%s347 + $0x8] sm:$0xff]
        %v350 = vmul.f32 %v348, %v259
        %v351 = vmul.f32 %v349, %v260
        %v352 = vadd.f32 %v255, %v350
        %v353 = vadd.f32 %v256, %v351
        %v354 = vmax.f32 %v352, 0.0
        %v355 = vmax.f32 %v353, 0.0
        %v356 = vmin.f32 %v354, 32.0
        %v357 = vmin.f32 %v355, 32.0
        %s358 = scalar_lea.vmem %s227, %s346 [#allocation7]
        %359 = vst [vmem:[%s358] sm:$0xff] %v356
        %360 = vst [vmem:[%s358 + $0x8] sm:$0xff] %v357
        %s361 = sadd.s32 0, 192
        %s362 = scalar_lea.vmem %s201, %s361 [#allocation5]
        %v363 = vld [vmem:[%s362] sm:$0xff]
        %v364 = vld [vmem:[%s362 + $0x8] sm:$0xff]
        %v365 = vmul.f32 %v363, %v257
        %v366 = vmul.f32 %v364, %v258
        %v367 = vadd.f32 %v251, %v365
        %v368 = vadd.f32 %v252, %v366
        %v369 = vmax.f32 %v367, 0.0
        %v370 = vmax.f32 %v368, 0.0
        %v371 = vmin.f32 %v369, 32.0
        %v372 = vmin.f32 %v370, 32.0
        %s373 = scalar_lea.vmem %s227, %s361 [#allocation7]
        %374 = vst [vmem:[%s373] sm:$0xff] %v371
        %375 = vst [vmem:[%s373 + $0x8] sm:$0xff] %v372
        %s376 = sadd.s32 0, 224
        %s377 = scalar_lea.vmem %s201, %s376 [#allocation5]
        %v378 = vld [vmem:[%s377] sm:$0xff]
        %v379 = vld [vmem:[%s377 + $0x8] sm:$0xff]
        %v380 = vmul.f32 %v378, %v259
        %v381 = vmul.f32 %v379, %v260
        %v382 = vadd.f32 %v255, %v380
        %v383 = vadd.f32 %v256, %v381
        %v384 = vmax.f32 %v382, 0.0
        %v385 = vmax.f32 %v383, 0.0
        %v386 = vmin.f32 %v384, 32.0
        %v387 = vmin.f32 %v385, 32.0
        %s388 = scalar_lea.vmem %s227, %s376 [#allocation7]
        %389 = vst [vmem:[%s388] sm:$0xff] %v386
        %390 = vst [vmem:[%s388 + $0x8] sm:$0xff] %v387
        %s391 = sadd.s32 0, 256
        %s392 = scalar_lea.vmem %s201, %s391 [#allocation5]
        %v393 = vld [vmem:[%s392] sm:$0xff]
        %v394 = vld [vmem:[%s392 + $0x8] sm:$0xff]
        %v395 = vmul.f32 %v393, %v257
        %v396 = vmul.f32 %v394, %v258
        %v397 = vadd.f32 %v251, %v395
        %v398 = vadd.f32 %v252, %v396
        %v399 = vmax.f32 %v397, 0.0
        %v400 = vmax.f32 %v398, 0.0
        %v401 = vmin.f32 %v399, 32.0
        %v402 = vmin.f32 %v400, 32.0
        %s403 = scalar_lea.vmem %s227, %s391 [#allocation7]
        %404 = vst [vmem:[%s403] sm:$0xff] %v401
        %405 = vst [vmem:[%s403 + $0x8] sm:$0xff] %v402
        %s406 = sadd.s32 0, 288
        %s407 = scalar_lea.vmem %s201, %s406 [#allocation5]
        %v408 = vld [vmem:[%s407] sm:$0xff]
        %v409 = vld [vmem:[%s407 + $0x8] sm:$0xff]
        %v410 = vmul.f32 %v408, %v259
        %v411 = vmul.f32 %v409, %v260
        %v412 = vadd.f32 %v255, %v410
        %v413 = vadd.f32 %v256, %v411
        %v414 = vmax.f32 %v412, 0.0
        %v415 = vmax.f32 %v413, 0.0
        %v416 = vmin.f32 %v414, 32.0
        %v417 = vmin.f32 %v415, 32.0
        %s418 = scalar_lea.vmem %s227, %s406 [#allocation7]
        %419 = vst [vmem:[%s418] sm:$0xff] %v416
        %420 = vst [vmem:[%s418 + $0x8] sm:$0xff] %v417
        %s421 = sadd.s32 0, 320
        %s422 = scalar_lea.vmem %s201, %s421 [#allocation5]
        %v423 = vld [vmem:[%s422] sm:$0xff]
        %v424 = vld [vmem:[%s422 + $0x8] sm:$0xff]
        %v425 = vmul.f32 %v423, %v257
        %v426 = vmul.f32 %v424, %v258
        %v427 = vadd.f32 %v251, %v425
        %v428 = vadd.f32 %v252, %v426
        %v429 = vmax.f32 %v427, 0.0
        %v430 = vmax.f32 %v428, 0.0
        %v431 = vmin.f32 %v429, 32.0
        %v432 = vmin.f32 %v430, 32.0
        %s433 = scalar_lea.vmem %s227, %s421 [#allocation7]
        %434 = vst [vmem:[%s433] sm:$0xff] %v431
        %435 = vst [vmem:[%s433 + $0x8] sm:$0xff] %v432
        %s436 = sadd.s32 0, 352
        %s437 = scalar_lea.vmem %s201, %s436 [#allocation5]
        %v438 = vld [vmem:[%s437] sm:$0xff]
        %v439 = vld [vmem:[%s437 + $0x8] sm:$0xff]
        %v440 = vmul.f32 %v438, %v259
        %v441 = vmul.f32 %v439, %v260
        %v442 = vadd.f32 %v255, %v440
        %v443 = vadd.f32 %v256, %v441
        %v444 = vmax.f32 %v442, 0.0
        %v445 = vmax.f32 %v443, 0.0
        %v446 = vmin.f32 %v444, 32.0
        %v447 = vmin.f32 %v445, 32.0
        %s448 = scalar_lea.vmem %s227, %s436 [#allocation7]
        %449 = vst [vmem:[%s448] sm:$0xff] %v446
        %450 = vst [vmem:[%s448 + $0x8] sm:$0xff] %v447
        %s451 = sadd.s32 0, 384
        %s452 = scalar_lea.vmem %s201, %s451 [#allocation5]
        %v453 = vld [vmem:[%s452] sm:$0xff]
        %v454 = vld [vmem:[%s452 + $0x8] sm:$0xff]
        %v455 = vmul.f32 %v453, %v257
        %v456 = vmul.f32 %v454, %v258
        %v457 = vadd.f32 %v251, %v455
        %v458 = vadd.f32 %v252, %v456
        %v459 = vmax.f32 %v457, 0.0
        %v460 = vmax.f32 %v458, 0.0
        %v461 = vmin.f32 %v459, 32.0
        %v462 = vmin.f32 %v460, 32.0
        %s463 = scalar_lea.vmem %s227, %s451 [#allocation7]
        %464 = vst [vmem:[%s463] sm:$0xff] %v461
        %465 = vst [vmem:[%s463 + $0x8] sm:$0xff] %v462
        %s466 = sadd.s32 0, 416
        %s467 = scalar_lea.vmem %s201, %s466 [#allocation5]
        %v468 = vld [vmem:[%s467] sm:$0xff]
        %v469 = vld [vmem:[%s467 + $0x8] sm:$0xff]
        %v470 = vmul.f32 %v468, %v259
        %v471 = vmul.f32 %v469, %v260
        %v472 = vadd.f32 %v255, %v470
        %v473 = vadd.f32 %v256, %v471
        %v474 = vmax.f32 %v472, 0.0
        %v475 = vmax.f32 %v473, 0.0
        %v476 = vmin.f32 %v474, 32.0
        %v477 = vmin.f32 %v475, 32.0
        %s478 = scalar_lea.vmem %s227, %s466 [#allocation7]
        %479 = vst [vmem:[%s478] sm:$0xff] %v476
        %480 = vst [vmem:[%s478 + $0x8] sm:$0xff] %v477
        %s481 = scalar_lea.vmem %s191, 16 [#allocation2]
        %v482 = vld [vmem:[%s481] sm:$0xff]
        %v483 = vld [vmem:[%s481 + $0x8] sm:$0xff]
        %s484 = sadd.s32 16, 32
        %s485 = scalar_lea.vmem %s191, %s484 [#allocation2]
        %v486 = vld [vmem:[%s485] sm:$0xff]
        %v487 = vld [vmem:[%s485 + $0x8] sm:$0xff]
        %s488 = sadd.s32 16, 64
        %s489 = scalar_lea.vmem %s191, %s488 [#allocation2]
        %v490 = vld [vmem:[%s489] sm:$0xff]
        %v491 = vld [vmem:[%s489 + $0x8] sm:$0xff]
        %s492 = sadd.s32 16, 96
        %s493 = scalar_lea.vmem %s191, %s492 [#allocation2]
        %v494 = vld [vmem:[%s493] sm:$0xff]
        %v495 = vld [vmem:[%s493 + $0x8] sm:$0xff]
        %v496 = vsub.f32 %v490, %v482
        %v497 = vsub.f32 %v491, %v483
        %v498 = vsub.f32 %v494, %v486
        %v499 = vsub.f32 %v495, %v487
        %v500 = vmul.f32 %v496, 0.5
        %v501 = vmul.f32 %v497, 0.5
        %v502 = vadd.f32 %v482, %v500
        %v503 = vadd.f32 %v483, %v501
        %v504 = vmul.f32 %v498, 0.5
        %v505 = vmul.f32 %v499, 0.5
        %v506 = vadd.f32 %v486, %v504
        %v507 = vadd.f32 %v487, %v505
        %v508 = vmul.f32 %v496, 0.1
        %v509 = vmul.f32 %v497, 0.1
        %v510 = vmul.f32 %v498, 0.1
        %v511 = vmul.f32 %v499, 0.1
        %s512 = scalar_lea.vmem %s201, 16 [#allocation5]
        %v513 = vld [vmem:[%s512] sm:$0xff]
        %v514 = vld [vmem:[%s512 + $0x8] sm:$0xff]
        %v515 = vmul.f32 %v513, %v508
        %v516 = vmul.f32 %v514, %v509
        %v517 = vadd.f32 %v502, %v515
        %v518 = vadd.f32 %v503, %v516
        %s519 = scalar_lea.vmem %s201, %s484 [#allocation5]
        %v520 = vld [vmem:[%s519] sm:$0xff]
        %v521 = vld [vmem:[%s519 + $0x8] sm:$0xff]
        %v522 = vmul.f32 %v520, %v510
        %v523 = vmul.f32 %v521, %v511
        %v524 = vadd.f32 %v506, %v522
        %v525 = vadd.f32 %v507, %v523
        %s526 = scalar_lea.vmem %s201, %s488 [#allocation5]
        %v527 = vld [vmem:[%s526] sm:$0xff]
        %v528 = vld [vmem:[%s526 + $0x8] sm:$0xff]
        %v529 = vmul.f32 %v527, 0.2
        %v530 = vmul.f32 %v528, 0.2
        %v531 = vmul.f32 %v529, 1.442695
        %v532 = vpow.pop %v531
        %v533 = vmul.f32 %v530, 1.442695
        %v534 = vpow.pop %v533
        %v535 = vmul.f32 %v500, %v532
        %v536 = vmul.f32 %v501, %v534
        %s537 = scalar_lea.vmem %s201, %s492 [#allocation5]
        %v538 = vld [vmem:[%s537] sm:$0xff]
        %v539 = vld [vmem:[%s537 + $0x8] sm:$0xff]
        %v540 = vmul.f32 %v538, 0.2
        %v541 = vmul.f32 %v539, 0.2
        %v542 = vmul.f32 %v540, 1.442695
        %v543 = vpow.pop %v542
        %v544 = vmul.f32 %v541, 1.442695
        %v545 = vpow.pop %v544
        %v546 = vmul.f32 %v504, %v543
        %v547 = vmul.f32 %v505, %v545
        %v548 = vsub.f32 %v517, %v535
        %v549 = vsub.f32 %v518, %v536
        %v550 = vmax.f32 %v548, 0.0
        %v551 = vmax.f32 %v549, 0.0
        %v552 = vmin.f32 %v550, 32.0
        %v553 = vmin.f32 %v551, 32.0
        %s554 = scalar_lea.vmem %s227, 16 [#allocation7]
        %555 = vst [vmem:[%s554] sm:$0xff] %v552
        %556 = vst [vmem:[%s554 + $0x8] sm:$0xff] %v553
        %v557 = vsub.f32 %v524, %v546
        %v558 = vsub.f32 %v525, %v547
        %v559 = vmax.f32 %v557, 0.0
        %v560 = vmax.f32 %v558, 0.0
        %v561 = vmin.f32 %v559, 32.0
        %v562 = vmin.f32 %v560, 32.0
        %s563 = scalar_lea.vmem %s227, %s484 [#allocation7]
        %564 = vst [vmem:[%s563] sm:$0xff] %v561
        %565 = vst [vmem:[%s563 + $0x8] sm:$0xff] %v562
        %v566 = vadd.f32 %v517, %v535
        %v567 = vadd.f32 %v518, %v536
        %v568 = vmax.f32 %v566, 0.0
        %v569 = vmax.f32 %v567, 0.0
        %v570 = vmin.f32 %v568, 32.0
        %v571 = vmin.f32 %v569, 32.0
        %s572 = scalar_lea.vmem %s227, %s488 [#allocation7]
        %573 = vst [vmem:[%s572] sm:$0xff] %v570
        %574 = vst [vmem:[%s572 + $0x8] sm:$0xff] %v571
        %v575 = vadd.f32 %v524, %v546
        %v576 = vadd.f32 %v525, %v547
        %v577 = vmax.f32 %v575, 0.0
        %v578 = vmax.f32 %v576, 0.0
        %v579 = vmin.f32 %v577, 32.0
        %v580 = vmin.f32 %v578, 32.0
        %s581 = scalar_lea.vmem %s227, %s492 [#allocation7]
        %582 = vst [vmem:[%s581] sm:$0xff] %v579
        %583 = vst [vmem:[%s581 + $0x8] sm:$0xff] %v580
        %s584 = sadd.s32 16, 128
        %s585 = scalar_lea.vmem %s201, %s584 [#allocation5]
        %v586 = vld [vmem:[%s585] sm:$0xff]
        %v587 = vld [vmem:[%s585 + $0x8] sm:$0xff]
        %v588 = vmul.f32 %v586, %v508
        %v589 = vmul.f32 %v587, %v509
        %v590 = vadd.f32 %v502, %v588
        %v591 = vadd.f32 %v503, %v589
        %v592 = vmax.f32 %v590, 0.0
        %v593 = vmax.f32 %v591, 0.0
        %v594 = vmin.f32 %v592, 32.0
        %v595 = vmin.f32 %v593, 32.0
        %s596 = scalar_lea.vmem %s227, %s584 [#allocation7]
        %597 = vst [vmem:[%s596] sm:$0xff] %v594
        %598 = vst [vmem:[%s596 + $0x8] sm:$0xff] %v595
        %s599 = sadd.s32 16, 160
        %s600 = scalar_lea.vmem %s201, %s599 [#allocation5]
        %v601 = vld [vmem:[%s600] sm:$0xff]
        %v602 = vld [vmem:[%s600 + $0x8] sm:$0xff]
        %v603 = vmul.f32 %v601, %v510
        %v604 = vmul.f32 %v602, %v511
        %v605 = vadd.f32 %v506, %v603
        %v606 = vadd.f32 %v507, %v604
        %v607 = vmax.f32 %v605, 0.0
        %v608 = vmax.f32 %v606, 0.0
        %v609 = vmin.f32 %v607, 32.0
        %v610 = vmin.f32 %v608, 32.0
        %s611 = scalar_lea.vmem %s227, %s599 [#allocation7]
        %612 = vst [vmem:[%s611] sm:$0xff] %v609
        %613 = vst [vmem:[%s611 + $0x8] sm:$0xff] %v610
        %s614 = sadd.s32 16, 192
        %s615 = scalar_lea.vmem %s201, %s614 [#allocation5]
        %v616 = vld [vmem:[%s615] sm:$0xff]
        %v617 = vld [vmem:[%s615 + $0x8] sm:$0xff]
        %v618 = vmul.f32 %v616, %v508
        %v619 = vmul.f32 %v617, %v509
        %v620 = vadd.f32 %v502, %v618
        %v621 = vadd.f32 %v503, %v619
        %v622 = vmax.f32 %v620, 0.0
        %v623 = vmax.f32 %v621, 0.0
        %v624 = vmin.f32 %v622, 32.0
        %v625 = vmin.f32 %v623, 32.0
        %s626 = scalar_lea.vmem %s227, %s614 [#allocation7]
        %627 = vst [vmem:[%s626] sm:$0xff] %v624
        %628 = vst [vmem:[%s626 + $0x8] sm:$0xff] %v625
        %s629 = sadd.s32 16, 224
        %s630 = scalar_lea.vmem %s201, %s629 [#allocation5]
        %v631 = vld [vmem:[%s630] sm:$0xff]
        %v632 = vld [vmem:[%s630 + $0x8] sm:$0xff]
        %v633 = vmul.f32 %v631, %v510
        %v634 = vmul.f32 %v632, %v511
        %v635 = vadd.f32 %v506, %v633
        %v636 = vadd.f32 %v507, %v634
        %v637 = vmax.f32 %v635, 0.0
        %v638 = vmax.f32 %v636, 0.0
        %v639 = vmin.f32 %v637, 32.0
        %v640 = vmin.f32 %v638, 32.0
        %s641 = scalar_lea.vmem %s227, %s629 [#allocation7]
        %642 = vst [vmem:[%s641] sm:$0xff] %v639
        %643 = vst [vmem:[%s641 + $0x8] sm:$0xff] %v640
        %s644 = sadd.s32 16, 256
        %s645 = scalar_lea.vmem %s201, %s644 [#allocation5]
        %v646 = vld [vmem:[%s645] sm:$0xff]
        %v647 = vld [vmem:[%s645 + $0x8] sm:$0xff]
        %v648 = vmul.f32 %v646, %v508
        %v649 = vmul.f32 %v647, %v509
        %v650 = vadd.f32 %v502, %v648
        %v651 = vadd.f32 %v503, %v649
        %v652 = vmax.f32 %v650, 0.0
        %v653 = vmax.f32 %v651, 0.0
        %v654 = vmin.f32 %v652, 32.0
        %v655 = vmin.f32 %v653, 32.0
        %s656 = scalar_lea.vmem %s227, %s644 [#allocation7]
        %657 = vst [vmem:[%s656] sm:$0xff] %v654
        %658 = vst [vmem:[%s656 + $0x8] sm:$0xff] %v655
        %s659 = sadd.s32 16, 288
        %s660 = scalar_lea.vmem %s201, %s659 [#allocation5]
        %v661 = vld [vmem:[%s660] sm:$0xff]
        %v662 = vld [vmem:[%s660 + $0x8] sm:$0xff]
        %v663 = vmul.f32 %v661, %v510
        %v664 = vmul.f32 %v662, %v511
        %v665 = vadd.f32 %v506, %v663
        %v666 = vadd.f32 %v507, %v664
        %v667 = vmax.f32 %v665, 0.0
        %v668 = vmax.f32 %v666, 0.0
        %v669 = vmin.f32 %v667, 32.0
        %v670 = vmin.f32 %v668, 32.0
        %s671 = scalar_lea.vmem %s227, %s659 [#allocation7]
        %672 = vst [vmem:[%s671] sm:$0xff] %v669
        %673 = vst [vmem:[%s671 + $0x8] sm:$0xff] %v670
        %s674 = sadd.s32 16, 320
        %s675 = scalar_lea.vmem %s201, %s674 [#allocation5]
        %v676 = vld [vmem:[%s675] sm:$0xff]
        %v677 = vld [vmem:[%s675 + $0x8] sm:$0xff]
        %v678 = vmul.f32 %v676, %v508
        %v679 = vmul.f32 %v677, %v509
        %v680 = vadd.f32 %v502, %v678
        %v681 = vadd.f32 %v503, %v679
        %v682 = vmax.f32 %v680, 0.0
        %v683 = vmax.f32 %v681, 0.0
        %v684 = vmin.f32 %v682, 32.0
        %v685 = vmin.f32 %v683, 32.0
        %s686 = scalar_lea.vmem %s227, %s674 [#allocation7]
        %687 = vst [vmem:[%s686] sm:$0xff] %v684
        %688 = vst [vmem:[%s686 + $0x8] sm:$0xff] %v685
        %s689 = sadd.s32 16, 352
        %s690 = scalar_lea.vmem %s201, %s689 [#allocation5]
        %v691 = vld [vmem:[%s690] sm:$0xff]
        %v692 = vld [vmem:[%s690 + $0x8] sm:$0xff]
        %v693 = vmul.f32 %v691, %v510
        %v694 = vmul.f32 %v692, %v511
        %v695 = vadd.f32 %v506, %v693
        %v696 = vadd.f32 %v507, %v694
        %v697 = vmax.f32 %v695, 0.0
        %v698 = vmax.f32 %v696, 0.0
        %v699 = vmin.f32 %v697, 32.0
        %v700 = vmin.f32 %v698, 32.0
        %s701 = scalar_lea.vmem %s227, %s689 [#allocation7]
        %702 = vst [vmem:[%s701] sm:$0xff] %v699
        %703 = vst [vmem:[%s701 + $0x8] sm:$0xff] %v700
        %s704 = sadd.s32 16, 384
        %s705 = scalar_lea.vmem %s201, %s704 [#allocation5]
        %v706 = vld [vmem:[%s705] sm:$0xff]
        %v707 = vld [vmem:[%s705 + $0x8] sm:$0xff]
        %v708 = vmul.f32 %v706, %v508
        %v709 = vmul.f32 %v707, %v509
        %v710 = vadd.f32 %v502, %v708
        %v711 = vadd.f32 %v503, %v709
        %v712 = vmax.f32 %v710, 0.0
        %v713 = vmax.f32 %v711, 0.0
        %v714 = vmin.f32 %v712, 32.0
        %v715 = vmin.f32 %v713, 32.0
        %s716 = scalar_lea.vmem %s227, %s704 [#allocation7]
        %717 = vst [vmem:[%s716] sm:$0xff] %v714
        %718 = vst [vmem:[%s716 + $0x8] sm:$0xff] %v715
        %s719 = sadd.s32 16, 416
        %s720 = scalar_lea.vmem %s201, %s719 [#allocation5]
        %v721 = vld [vmem:[%s720] sm:$0xff]
        %v722 = vld [vmem:[%s720 + $0x8] sm:$0xff]
        %v723 = vmul.f32 %v721, %v510
        %v724 = vmul.f32 %v722, %v511
        %v725 = vadd.f32 %v506, %v723
        %v726 = vadd.f32 %v507, %v724
        %v727 = vmax.f32 %v725, 0.0
        %v728 = vmax.f32 %v726, 0.0
        %v729 = vmin.f32 %v727, 32.0
        %v730 = vmin.f32 %v728, 32.0
        %s731 = scalar_lea.vmem %s227, %s719 [#allocation7]
        %732 = vst [vmem:[%s731] sm:$0xff] %v729
        %733 = vst [vmem:[%s731 + $0x8] sm:$0xff] %v730
        %s734 = sand.u32 %s100, 1
        %s735 = scalar_lea.sflag [#allocation4], %s734
        %s736 = sand.u32 %s100, 1
        %s737 = smul.addr %s736, 448
        %s738 = scalar_lea.vmem [#allocation7], %s737
        // Predicated region
        $region37: #{tpu_custom_call.1} parent=27 // pred_check
          %p739 = pneg %p110
        $region38: #{tpu_custom_call.1} parent=27 // pred_check_branch
          %741 = sbr.rel (%p739) target = $region40
        $region39: #{tpu_custom_call.1} parent=27 // pred_region
          %s742 = smul.u32 4, %s27
          %744 = vsyncadd %s735, 0
          %s745 = smul.addr %s26, 56
          %s746 = sadd.s32 %s742, %s745
          %s747 = smul.addr %s746, 8
          %s748 = scalar_lea.hbm %s2, %s747
          %s749 = sshll.u32 %s738, 4
          %s750 = int_to_ptr.vmem [resolvable:$true] %s749
          %s751 = sshll.u32 %s748, 4
          %s752 = int_to_ptr.hbm [resolvable:$true] %s751
          %757 = dma.vmem_to_hbm [thread:$0]  %s750, 7168, %s752, %s735, 128, 128, 8
        $region40: #{tpu_custom_call.1} parent=27 // pred_fallthru
          _
      $region28: #{tpu_custom_call.1} parent=5 // pred_fallthru
        _
      %p758 = scmp.le.s32.totalorder 2, %s17
      // Predicated region
      $region41: #{tpu_custom_call.1} parent=5 // pred_check
        %p759 = pneg %p758
      $region42: #{tpu_custom_call.1} parent=5 // pred_check_branch
        %761 = sbr.rel (%p759) target = $region44
      $region43: #{tpu_custom_call.1} parent=5 // pred_region
        %s762 = ssub.s32 %s17, 2
        // Predicated region
        $region45: #{tpu_custom_call.1} parent=43 // pred_check
          %p763 = pneg %p116
        $region46: #{tpu_custom_call.1} parent=43 // pred_check_branch
          %765 = sbr.rel (%p763) target = $region48
        $region47: #{tpu_custom_call.1} parent=43 // pred_region
          %s766 = sand.u32 %s101, 1
          %s767 = scalar_lea.sflag [#allocation4], %s766
          %s768 = sand.u32 %s101, 1
          %s769 = smul.addr %s768, 448
          %s770 = scalar_lea.vmem [#allocation7], %s769
          %772 = dma.done %s767, 7168
        $region48: #{tpu_custom_call.1} parent=43 // pred_fallthru
          _
      $region44: #{tpu_custom_call.1} parent=5 // pred_fallthru
        _
    $region6: #{tpu_custom_call.1} parent=1 // loop_footer
      %s21 = sadd.s32 1, %s17
    $region7: #{tpu_custom_call.1} parent=1 // loop_footer_branch
      %16 = sbr.rel target = $region3
    $region8: #{tpu_custom_call.1} parent=1 // loop_exit
      _
    %773 = vsyncpa [#allocation3], 1
    %s774 = scalar_lea.sflag [#allocation3], 1
    %775 = vsyncpa %s774, 1
    %776 = vsyncpa [#allocation6], 1
    %s777 = scalar_lea.sflag [#allocation6], 1
    %778 = vsyncpa %s777, 1
    %779 = vsyncpa [#allocation4], 1
    %s780 = scalar_lea.sflag [#allocation4], 1
    %781 = vsyncpa %s780, 1

</llo_original>
